<compile_context>
chip_gen: v7x
topology: tpu7x:2x2x1
jax: 0.10.0
libtpu: 0.0.40
codegen_flags: <defaults>
</compile_context>

<pallas_src>
import jax
import jax.numpy as jnp
import numpy as np
from jax import lax
from jax.experimental import pallas as pl
from jax.experimental.pallas import tpu as pltpu

CONFIG = dict(
    n_input=16, n_context=1,                 # conv kernel size = 2*1+1 = 3
    n_hidden_1=32, n_hidden_2=32, n_hidden_3=32,
    n_cell_dim=32, n_hidden_5=32, n_hidden_6=16,
    dropout=[0.0] * 6,
)


# ---------------------------------------------------------------------------
# Fused forward kernel: conv (tap-shifted matmuls) -> MLP -> LSTM -> head.
# ---------------------------------------------------------------------------
def _fused_forward(x_tm, w_conv, b_conv, w2, b2, w3, b3,
                   w_ih_t, w_hh_t, b_gate, w5, b5, w6, *, B_pad, T):
    """x_tm: ((T+2*ctx)*B_pad, n_input) time-major, batch-padded, zero-padded
    in time, bf16.  Returns a (T*B_pad, n_hidden_6) f32 time-major slab."""
    K, n_in, H1 = w_conv.shape
    H2 = w2.shape[1]
    H3 = w3.shape[1]
    C = w_hh_t.shape[0]
    H5 = w5.shape[1]
    H6 = w6.shape[1]
    R = T * B_pad                       # total (time-major) activation rows

    def kernel(xp_ref, wc_ref, bc_ref, w2_ref, b2_ref, w3_ref, b3_ref,
               wih_ref, whh_ref, bg_ref, w5_ref, b5_ref, w6_ref,
               o_ref, gx_ref, hs_ref):
        # ---- layer_1: Conv1d as K sublane-shifted matmuls (no im2col) ------
        # Row layout is time-major (row = t*B_pad + b), so a shift of one
        # timestep is a static, 8-aligned sublane offset of B_pad rows.
        acc = jnp.zeros((R, H1), jnp.float32)
        for k in range(K):                               # K = 3, static unroll
            xs = xp_ref[k * B_pad:k * B_pad + R, :]      # aligned static view
            acc = acc + jnp.dot(xs, wc_ref[k],
                                preferred_element_type=jnp.float32)
        h1 = jnp.maximum(acc + bc_ref[...], 0.0)
        # TODO(synk): F.dropout is stochastic; implemented as identity (p=0 /
        # inference), matching the reference semantics for dropout=[0]*6.

        # ---- layer_2 / layer_3 (bf16 MXU operands, f32 accumulate) ---------
        h2 = jnp.maximum(
            jnp.dot(h1.astype(jnp.bfloat16), w2_ref[...],
                    preferred_element_type=jnp.float32) + b2_ref[...], 0.0)
        h3 = jnp.maximum(
            jnp.dot(h2.astype(jnp.bfloat16), w3_ref[...],
                    preferred_element_type=jnp.float32) + b3_ref[...], 0.0)

        # Hoist the LSTM input projection out of the recurrence: one matmul
        # over every timestep, staged in a VMEM scratch for pl.ds reads.
        gx_ref[...] = (jnp.dot(h3.astype(jnp.bfloat16), wih_ref[...],
                               preferred_element_type=jnp.float32)
                       + bg_ref[...])                       # (T*B_pad, 4C)

        # ---- LSTM recurrence (PyTorch gate order i, f, g, o) ---------------
        whh = whh_ref[...]                                  # (C, 4C) bf16
        # NOTE: W_hh could be held weight-stationary across the recurrence via
        # pltpu.matmul_push_rhs/_acc_lhs/_pop; deferred (jnp.dot is kept for
        # robustness at these shapes).

        def step(t, carry):
            h, cst = carry
            row0 = pl.multiple_of(t * B_pad, 8)             # 8-aligned slice
            gates = (gx_ref[pl.ds(row0, B_pad), :]
                     + jnp.dot(h.astype(jnp.bfloat16), whh,
                               preferred_element_type=jnp.float32))  # (B_pad,4C)
            # (B_pad, 4C) = one (8,128) vreg: full-lane sigmoid + tanh is the
            # minimum EUP granularity here, then lane-slice the gates.
            sg = jax.nn.sigmoid(gates)
            th = jnp.tanh(gates)
            i_g = sg[:, 0 * C:1 * C]
            f_g = sg[:, 1 * C:2 * C]
            o_g = sg[:, 3 * C:4 * C]
            g_g = th[:, 2 * C:3 * C]
            c_new = f_g * cst + i_g * g_g
            h_new = o_g * jnp.tanh(c_new)
            hs_ref[pl.ds(row0, B_pad), :] = h_new           # time-major store
            return (h_new, c_new)

        init = (jnp.zeros((B_pad, C), jnp.float32),
                jnp.zeros((B_pad, C), jnp.float32))
        lax.fori_loop(0, T, step, init, unroll=(T <= 16))

        # ---- layer_5 + layer_6 head: two full-width matmuls, one store -----
        hs_bf = hs_ref[...].astype(jnp.bfloat16)            # (T*B_pad, C)
        h5 = jnp.maximum(
            jnp.dot(hs_bf, w5_ref[...],
                    preferred_element_type=jnp.float32) + b5_ref[...], 0.0)
        o_ref[...] = jnp.dot(h5.astype(jnp.bfloat16), w6_ref[...],
                             preferred_element_type=jnp.float32)

    flops = 2 * R * (K * n_in * H1 + H1 * H2 + H2 * H3 + H3 * 4 * C
                     + C * 4 * C + C * H5 + H5 * H6)
    transcendentals = R * (2 * 4 * C + C)
    bytes_accessed = int(
        sum(int(a.size) * a.dtype.itemsize for a in
            (x_tm, w_conv, b_conv, w2, b2, w3, b3,
             w_ih_t, w_hh_t, b_gate, w5, b5, w6)) + R * H6 * 4)

    # Single-invocation call (no grid): every operand/output is a whole-array
    # VMEM-resident block.  For production T*B the non-recurrent layers would
    # be row-tiled via a grid + BlockSpec with an explicit vmem_limit_bytes
    # (and a batch-parallel axis for v7x's second TensorCore).
    return pl.pallas_call(
        kernel,
        out_shape=jax.ShapeDtypeStruct((R, H6), jnp.float32),
        scratch_shapes=[pltpu.VMEM((R, 4 * C), jnp.float32),   # gx
                        pltpu.VMEM((R, C), jnp.float32)],      # hs
        cost_estimate=pl.CostEstimate(flops=flops,
                                      transcendentals=transcendentals,
                                      bytes_accessed=bytes_accessed),
    )(x_tm, w_conv, b_conv, w2, b2, w3, b3,
      w_ih_t, w_hh_t, b_gate, w5, b5, w6)


# ---------------------------------------------------------------------------
# Full forward (mirrors DeepSpeech1.forward with previous_state=None).
# ---------------------------------------------------------------------------
def deepspeech1_forward(params, x_btf, seq_length=None):
    c = CONFIG
    B, T, n_in = x_btf.shape
    ctx = c['n_context']
    H6 = c['n_hidden_6']
    # Sublane-align the batch stride (time-major row = t*B_pad + b).
    B_pad = max(8, ((B + 7) // 8) * 8)
    # Zero-pad batch to B_pad and time by ctx on both sides; bf16 for the MXU.
    # (seq_length is unused by the PyTorch forward as well.)
    xp = jnp.pad(x_btf, ((0, B_pad - B), (ctx, ctx), (0, 0)))
    x_tm = (jnp.transpose(xp, (1, 0, 2))
               .reshape((T + 2 * ctx) * B_pad, n_in)
               .astype(jnp.bfloat16))

    bf = lambda a: a.astype(jnp.bfloat16)
    out_tm = _fused_forward(
        x_tm, bf(params['w_conv']), params['b_conv'],
        bf(params['w2']), params['b2'], bf(params['w3']), params['b3'],
        bf(params['w_ih_t']), bf(params['w_hh_t']), params['b_gate'],
        bf(params['w5']), params['b5'], bf(params['w6']),
        B_pad=B_pad, T=T)
    # Lane-contiguous slab -> (B, T, H6): free layout plumbing in the wrapper.
    return out_tm.reshape(T, B_pad, H6)[:, :B, :].transpose(1, 0, 2)


# ---------------------------------------------------------------------------
# Deterministic parameter init (synthetic weights; shapes from __init__).
# ---------------------------------------------------------------------------
def init_params(key):
    c = CONFIG
    K = 2 * c['n_context'] + 1
    keys = jax.random.split(key, 12)

    def nrm(k, shape, scale=0.1):
        return scale * jax.random.normal(k, shape, jnp.float32)

    return dict(
        w_conv=nrm(keys[0], (K, c['n_input'], c['n_hidden_1'])),   # (K, Cin, Cout)
        b_conv=nrm(keys[1], (1, c['n_hidden_1'])),
        w2=nrm(keys[2], (c['n_hidden_1'], c['n_hidden_2'])),
        b2=nrm(keys[3], (1, c['n_hidden_2'])),
        w3=nrm(keys[4], (c['n_hidden_2'], c['n_hidden_3'])),
        b3=nrm(keys[5], (1, c['n_hidden_3'])),
        w_ih_t=nrm(keys[6], (c['n_hidden_3'], 4 * c['n_cell_dim'])),  # W_ih^T
        w_hh_t=nrm(keys[7], (c['n_cell_dim'], 4 * c['n_cell_dim'])),  # W_hh^T
        b_gate=nrm(keys[8], (1, 4 * c['n_cell_dim'])),                # b_ih + b_hh
        w5=nrm(keys[9], (c['n_cell_dim'], c['n_hidden_5'])),
        b5=nrm(keys[10], (1, c['n_hidden_5'])),
        w6=nrm(keys[11], (c['n_hidden_5'], c['n_hidden_6'])),
    )


# ---------------------------------------------------------------------------
# Pure-JAX reference (same math, f32) used to sanity check the Pallas kernel.
# ---------------------------------------------------------------------------
def reference_forward(params, x_btf):
    c = CONFIG
    ctx = c['n_context']
    B, T, _ = x_btf.shape
    K = 2 * ctx + 1
    xp = jnp.pad(x_btf, ((0, 0), (ctx, ctx), (0, 0)))
    h1 = sum(jnp.einsum('bti,io->bto', xp[:, k:k + T, :], params['w_conv'][k])
             for k in range(K))
    h1 = jax.nn.relu(h1 + params['b_conv'][0]).reshape(B * T, -1)
    h2 = jax.nn.relu(h1 @ params['w2'] + params['b2'][0])
    h3 = jax.nn.relu(h2 @ params['w3'] + params['b3'][0]).reshape(B, T, -1)
    C = c['n_cell_dim']

    def step(carry, x_t):
        h, cs = carry
        gates = x_t @ params['w_ih_t'] + h @ params['w_hh_t'] + params['b_gate'][0]
        i_g = jax.nn.sigmoid(gates[:, :C])
        f_g = jax.nn.sigmoid(gates[:, C:2 * C])
        g_g = jnp.tanh(gates[:, 2 * C:3 * C])
        o_g = jax.nn.sigmoid(gates[:, 3 * C:4 * C])
        c_new = f_g * cs + i_g * g_g
        h_new = o_g * jnp.tanh(c_new)
        return (h_new, c_new), h_new

    init = (jnp.zeros((B, C), jnp.float32), jnp.zeros((B, C), jnp.float32))
    _, hs = jax.lax.scan(step, init, h3.transpose(1, 0, 2))
    lstm_flat = hs.transpose(1, 0, 2).reshape(B * T, C)
    h5 = jax.nn.relu(lstm_flat @ params['w5'] + params['b5'][0])
    return (h5 @ params['w6']).reshape(B, T, c['n_hidden_6'])


if __name__ == "__main__":
    key = jax.random.PRNGKey(0)
    pkey, xkey = jax.random.split(key)
    params = init_params(pkey)

    B, T = 2, 8
    x = jax.random.normal(xkey, (B, T, CONFIG['n_input']), jnp.float32)
    seq_length = jnp.full((B,), T, dtype=jnp.int32)   # unused (matches signature)

    out = deepspeech1_forward(params, x, seq_length)
    out = jax.block_until_ready(out)

    ref = reference_forward(params, x)
    assert out.shape == (B, T, CONFIG['n_hidden_6'])
    if not np.allclose(np.asarray(out), np.asarray(ref), rtol=5e-2, atol=5e-2):
        raise AssertionError("Pallas output mismatch vs pure-JAX reference")

    print("KERNEL_OK")
</pallas_src>

<mosaic_0001>
module attributes {stable_mosaic.version = 11 : i64} {
  func.func @kernel(%arg0: memref<80x16xbf16, #tpu.memory_space<vmem>>, %arg1: memref<3x16x32xbf16, #tpu.memory_space<vmem>>, %arg2: memref<1x32xf32, #tpu.memory_space<vmem>>, %arg3: memref<32x32xbf16, #tpu.memory_space<vmem>>, %arg4: memref<1x32xf32, #tpu.memory_space<vmem>>, %arg5: memref<32x32xbf16, #tpu.memory_space<vmem>>, %arg6: memref<1x32xf32, #tpu.memory_space<vmem>>, %arg7: memref<32x128xbf16, #tpu.memory_space<vmem>>, %arg8: memref<32x128xbf16, #tpu.memory_space<vmem>>, %arg9: memref<1x128xf32, #tpu.memory_space<vmem>>, %arg10: memref<32x32xbf16, #tpu.memory_space<vmem>>, %arg11: memref<1x32xf32, #tpu.memory_space<vmem>>, %arg12: memref<32x16xbf16, #tpu.memory_space<vmem>>, %arg13: memref<64x16xf32, #tpu.memory_space<vmem>>, %arg14: memref<64x128xf32, #tpu.memory_space<vmem>>, %arg15: memref<64x32xf32, #tpu.memory_space<vmem>>) attributes {dimension_semantics = [], scalar_prefetch = 0 : i64, scratch_operands = 2 : i64, tpu.core_type = #tpu.core_type<tc>} {
    %cst = arith.constant 0.000000e+00 : f32
    %0 = vector.broadcast %cst : f32 to vector<64x32xf32>
    %c0 = arith.constant 0 : index
    %c0_0 = arith.constant 0 : index
    %1 = vector.load %arg0[%c0, %c0_0] : memref<80x16xbf16, #tpu.memory_space<vmem>>, vector<64x16xbf16>
    %c0_1 = arith.constant 0 : index
    %c0_2 = arith.constant 0 : index
    %c0_3 = arith.constant 0 : index
    %2 = vector.load %arg1[%c0_1, %c0_2, %c0_3] : memref<3x16x32xbf16, #tpu.memory_space<vmem>>, vector<1x16x32xbf16>
    %3 = vector.shape_cast %2 : vector<1x16x32xbf16> to vector<16x32xbf16>
    %cst_4 = arith.constant dense<0.000000e+00> : vector<64x32xf32>
    %4 = tpu.matmul %1, %3, %cst_4 {dimension_numbers = #tpu.dot_dimension_numbers<[1], [0], [0], [1], [0, 0, 1, 1], [], []>} : vector<64x16xbf16>, vector<16x32xbf16>, vector<64x32xf32> -> vector<64x32xf32>
    %5 = arith.addf %0, %4 : vector<64x32xf32>
    %c8 = arith.constant 8 : index
    %c0_5 = arith.constant 0 : index
    %6 = vector.load %arg0[%c8, %c0_5] : memref<80x16xbf16, #tpu.memory_space<vmem>>, vector<64x16xbf16>
    %c1 = arith.constant 1 : index
    %c0_6 = arith.constant 0 : index
    %c0_7 = arith.constant 0 : index
    %7 = vector.load %arg1[%c1, %c0_6, %c0_7] : memref<3x16x32xbf16, #tpu.memory_space<vmem>>, vector<1x16x32xbf16>
    %8 = vector.shape_cast %7 : vector<1x16x32xbf16> to vector<16x32xbf16>
    %cst_8 = arith.constant dense<0.000000e+00> : vector<64x32xf32>
    %9 = tpu.matmul %6, %8, %cst_8 {dimension_numbers = #tpu.dot_dimension_numbers<[1], [0], [0], [1], [0, 0, 1, 1], [], []>} : vector<64x16xbf16>, vector<16x32xbf16>, vector<64x32xf32> -> vector<64x32xf32>
    %10 = arith.addf %5, %9 : vector<64x32xf32>
    %c16 = arith.constant 16 : index
    %c0_9 = arith.constant 0 : index
    %11 = vector.load %arg0[%c16, %c0_9] : memref<80x16xbf16, #tpu.memory_space<vmem>>, vector<64x16xbf16>
    %c2 = arith.constant 2 : index
    %c0_10 = arith.constant 0 : index
    %c0_11 = arith.constant 0 : index
    %12 = vector.load %arg1[%c2, %c0_10, %c0_11] : memref<3x16x32xbf16, #tpu.memory_space<vmem>>, vector<1x16x32xbf16>
    %13 = vector.shape_cast %12 : vector<1x16x32xbf16> to vector<16x32xbf16>
    %cst_12 = arith.constant dense<0.000000e+00> : vector<64x32xf32>
    %14 = tpu.matmul %11, %13, %cst_12 {dimension_numbers = #tpu.dot_dimension_numbers<[1], [0], [0], [1], [0, 0, 1, 1], [], []>} : vector<64x16xbf16>, vector<16x32xbf16>, vector<64x32xf32> -> vector<64x32xf32>
    %15 = arith.addf %10, %14 : vector<64x32xf32>
    %c0_13 = arith.constant 0 : index
    %c0_14 = arith.constant 0 : index
    %16 = vector.load %arg2[%c0_13, %c0_14] : memref<1x32xf32, #tpu.memory_space<vmem>>, vector<1x32xf32>
    %17 = vector.broadcast %16 : vector<1x32xf32> to vector<64x32xf32>
    %18 = arith.addf %15, %17 : vector<64x32xf32>
    %cst_15 = arith.constant 0.000000e+00 : f32
    %19 = vector.broadcast %cst_15 : f32 to vector<64x32xf32>
    %20 = arith.maximumf %18, %19 : vector<64x32xf32>
    %21 = arith.truncf %20 : vector<64x32xf32> to vector<64x32xbf16>
    %c0_16 = arith.constant 0 : index
    %c0_17 = arith.constant 0 : index
    %22 = vector.load %arg3[%c0_16, %c0_17] : memref<32x32xbf16, #tpu.memory_space<vmem>>, vector<32x32xbf16>
    %cst_18 = arith.constant dense<0.000000e+00> : vector<64x32xf32>
    %23 = tpu.matmul %21, %22, %cst_18 {dimension_numbers = #tpu.dot_dimension_numbers<[1], [0], [0], [1], [0, 0, 1, 1], [], []>} : vector<64x32xbf16>, vector<32x32xbf16>, vector<64x32xf32> -> vector<64x32xf32>
    %c0_19 = arith.constant 0 : index
    %c0_20 = arith.constant 0 : index
    %24 = vector.load %arg4[%c0_19, %c0_20] : memref<1x32xf32, #tpu.memory_space<vmem>>, vector<1x32xf32>
    %25 = vector.broadcast %24 : vector<1x32xf32> to vector<64x32xf32>
    %26 = arith.addf %23, %25 : vector<64x32xf32>
    %cst_21 = arith.constant 0.000000e+00 : f32
    %27 = vector.broadcast %cst_21 : f32 to vector<64x32xf32>
    %28 = arith.maximumf %26, %27 : vector<64x32xf32>
    %29 = arith.truncf %28 : vector<64x32xf32> to vector<64x32xbf16>
    %c0_22 = arith.constant 0 : index
    %c0_23 = arith.constant 0 : index
    %30 = vector.load %arg5[%c0_22, %c0_23] : memref<32x32xbf16, #tpu.memory_space<vmem>>, vector<32x32xbf16>
    %cst_24 = arith.constant dense<0.000000e+00> : vector<64x32xf32>
    %31 = tpu.matmul %29, %30, %cst_24 {dimension_numbers = #tpu.dot_dimension_numbers<[1], [0], [0], [1], [0, 0, 1, 1], [], []>} : vector<64x32xbf16>, vector<32x32xbf16>, vector<64x32xf32> -> vector<64x32xf32>
    %c0_25 = arith.constant 0 : index
    %c0_26 = arith.constant 0 : index
    %32 = vector.load %arg6[%c0_25, %c0_26] : memref<1x32xf32, #tpu.memory_space<vmem>>, vector<1x32xf32>
    %33 = vector.broadcast %32 : vector<1x32xf32> to vector<64x32xf32>
    %34 = arith.addf %31, %33 : vector<64x32xf32>
    %cst_27 = arith.constant 0.000000e+00 : f32
    %35 = vector.broadcast %cst_27 : f32 to vector<64x32xf32>
    %36 = arith.maximumf %34, %35 : vector<64x32xf32>
    %37 = arith.truncf %36 : vector<64x32xf32> to vector<64x32xbf16>
    %c0_28 = arith.constant 0 : index
    %c0_29 = arith.constant 0 : index
    %38 = vector.load %arg7[%c0_28, %c0_29] : memref<32x128xbf16, #tpu.memory_space<vmem>>, vector<32x128xbf16>
    %cst_30 = arith.constant dense<0.000000e+00> : vector<64x128xf32>
    %39 = tpu.matmul %37, %38, %cst_30 {dimension_numbers = #tpu.dot_dimension_numbers<[1], [0], [0], [1], [0, 0, 1, 1], [], []>} : vector<64x32xbf16>, vector<32x128xbf16>, vector<64x128xf32> -> vector<64x128xf32>
    %c0_31 = arith.constant 0 : index
    %c0_32 = arith.constant 0 : index
    %40 = vector.load %arg9[%c0_31, %c0_32] : memref<1x128xf32, #tpu.memory_space<vmem>>, vector<1x128xf32>
    %41 = vector.broadcast %40 : vector<1x128xf32> to vector<64x128xf32>
    %42 = arith.addf %39, %41 : vector<64x128xf32>
    %c0_33 = arith.constant 0 : index
    %c0_34 = arith.constant 0 : index
    %43 = vector.load %arg14[%c0_33, %c0_34] : memref<64x128xf32, #tpu.memory_space<vmem>>, vector<64x128xf32>
    tpu.vector_store %arg14[%c0_33, %c0_34], %42 {strides = array<i32>} : memref<64x128xf32, #tpu.memory_space<vmem>>, vector<64x128xf32>,
    %c0_35 = arith.constant 0 : index
    %c0_36 = arith.constant 0 : index
    %44 = vector.load %arg8[%c0_35, %c0_36] : memref<32x128xbf16, #tpu.memory_space<vmem>>, vector<32x128xbf16>
    %cst_37 = arith.constant 0.000000e+00 : f32
    %45 = vector.broadcast %cst_37 : f32 to vector<8x32xf32>
    %cst_38 = arith.constant 0.000000e+00 : f32
    %46 = vector.broadcast %cst_38 : f32 to vector<8x32xf32>
    %c0_i32 = arith.constant 0 : i32
    %c8_i32 = arith.constant 8 : i32
    %47 = arith.muli %c0_i32, %c8_i32 : i32
    %48 = tpu.assume_multiple %47, 8 : i32
    %49 = arith.index_cast %48 : i32 to index
    %c0_39 = arith.constant 0 : index
    %50 = vector.load %arg14[%49, %c0_39] : memref<64x128xf32, #tpu.memory_space<vmem>>, vector<8x128xf32>
    %51 = arith.truncf %45 : vector<8x32xf32> to vector<8x32xbf16>
    %cst_40 = arith.constant dense<0.000000e+00> : vector<8x128xf32>
    %52 = tpu.matmul %51, %44, %cst_40 {dimension_numbers = #tpu.dot_dimension_numbers<[1], [0], [0], [1], [0, 0, 1, 1], [], []>} : vector<8x32xbf16>, vector<32x128xbf16>, vector<8x128xf32> -> vector<8x128xf32>
    %53 = arith.addf %50, %52 : vector<8x128xf32>
    %54 = arith.negf %53 : vector<8x128xf32>
    %55 = math.exp %54 : vector<8x128xf32>
    %cst_41 = arith.constant 1.000000e+00 : f32
    %56 = vector.broadcast %cst_41 : f32 to vector<8x128xf32>
    %57 = arith.addf %56, %55 : vector<8x128xf32>
    %58 = arith.divf %56, %57 : vector<8x128xf32>
    %59 = math.tanh %53 : vector<8x128xf32>
    %60 = vector.extract_strided_slice %58 {offsets = [0, 0], sizes = [8, 32], strides = [1, 1]} : vector<8x128xf32> to vector<8x32xf32>
    %61 = vector.extract_strided_slice %58 {offsets = [0, 32], sizes = [8, 32], strides = [1, 1]} : vector<8x128xf32> to vector<8x32xf32>
    %62 = vector.extract_strided_slice %58 {offsets = [0, 96], sizes = [8, 32], strides = [1, 1]} : vector<8x128xf32> to vector<8x32xf32>
    %63 = vector.extract_strided_slice %59 {offsets = [0, 64], sizes = [8, 32], strides = [1, 1]} : vector<8x128xf32> to vector<8x32xf32>
    %64 = arith.mulf %61, %46 : vector<8x32xf32>
    %65 = arith.mulf %60, %63 : vector<8x32xf32>
    %66 = arith.addf %64, %65 : vector<8x32xf32>
    %67 = math.tanh %66 : vector<8x32xf32>
    %68 = arith.mulf %62, %67 : vector<8x32xf32>
    %69 = arith.index_cast %48 : i32 to index
    %c0_42 = arith.constant 0 : index
    %70 = vector.load %arg15[%69, %c0_42] : memref<64x32xf32, #tpu.memory_space<vmem>>, vector<8x32xf32>
    tpu.vector_store %arg15[%69, %c0_42], %68 {strides = array<i32>} : memref<64x32xf32, #tpu.memory_space<vmem>>, vector<8x32xf32>,
    %c1_i32 = arith.constant 1 : i32
    %c8_i32_43 = arith.constant 8 : i32
    %71 = arith.muli %c1_i32, %c8_i32_43 : i32
    %72 = tpu.assume_multiple %71, 8 : i32
    %73 = arith.index_cast %72 : i32 to index
    %c0_44 = arith.constant 0 : index
    %74 = vector.load %arg14[%73, %c0_44] : memref<64x128xf32, #tpu.memory_space<vmem>>, vector<8x128xf32>
    %75 = arith.truncf %68 : vector<8x32xf32> to vector<8x32xbf16>
    %cst_45 = arith.constant dense<0.000000e+00> : vector<8x128xf32>
    %76 = tpu.matmul %75, %44, %cst_45 {dimension_numbers = #tpu.dot_dimension_numbers<[1], [0], [0], [1], [0, 0, 1, 1], [], []>} : vector<8x32xbf16>, vector<32x128xbf16>, vector<8x128xf32> -> vector<8x128xf32>
    %77 = arith.addf %74, %76 : vector<8x128xf32>
    %78 = arith.negf %77 : vector<8x128xf32>
    %79 = math.exp %78 : vector<8x128xf32>
    %cst_46 = arith.constant 1.000000e+00 : f32
    %80 = vector.broadcast %cst_46 : f32 to vector<8x128xf32>
    %81 = arith.addf %80, %79 : vector<8x128xf32>
    %82 = arith.divf %80, %81 : vector<8x128xf32>
    %83 = math.tanh %77 : vector<8x128xf32>
    %84 = vector.extract_strided_slice %82 {offsets = [0, 0], sizes = [8, 32], strides = [1, 1]} : vector<8x128xf32> to vector<8x32xf32>
    %85 = vector.extract_strided_slice %82 {offsets = [0, 32], sizes = [8, 32], strides = [1, 1]} : vector<8x128xf32> to vector<8x32xf32>
    %86 = vector.extract_strided_slice %82 {offsets = [0, 96], sizes = [8, 32], strides = [1, 1]} : vector<8x128xf32> to vector<8x32xf32>
    %87 = vector.extract_strided_slice %83 {offsets = [0, 64], sizes = [8, 32], strides = [1, 1]} : vector<8x128xf32> to vector<8x32xf32>
    %88 = arith.mulf %85, %66 : vector<8x32xf32>
    %89 = arith.mulf %84, %87 : vector<8x32xf32>
    %90 = arith.addf %88, %89 : vector<8x32xf32>
    %91 = math.tanh %90 : vector<8x32xf32>
    %92 = arith.mulf %86, %91 : vector<8x32xf32>
    %93 = arith.index_cast %72 : i32 to index
    %c0_47 = arith.constant 0 : index
    %94 = vector.load %arg15[%93, %c0_47] : memref<64x32xf32, #tpu.memory_space<vmem>>, vector<8x32xf32>
    tpu.vector_store %arg15[%93, %c0_47], %92 {strides = array<i32>} : memref<64x32xf32, #tpu.memory_space<vmem>>, vector<8x32xf32>,
    %c2_i32 = arith.constant 2 : i32
    %c8_i32_48 = arith.constant 8 : i32
    %95 = arith.muli %c2_i32, %c8_i32_48 : i32
    %96 = tpu.assume_multiple %95, 8 : i32
    %97 = arith.index_cast %96 : i32 to index
    %c0_49 = arith.constant 0 : index
    %98 = vector.load %arg14[%97, %c0_49] : memref<64x128xf32, #tpu.memory_space<vmem>>, vector<8x128xf32>
    %99 = arith.truncf %92 : vector<8x32xf32> to vector<8x32xbf16>
    %cst_50 = arith.constant dense<0.000000e+00> : vector<8x128xf32>
    %100 = tpu.matmul %99, %44, %cst_50 {dimension_numbers = #tpu.dot_dimension_numbers<[1], [0], [0], [1], [0, 0, 1, 1], [], []>} : vector<8x32xbf16>, vector<32x128xbf16>, vector<8x128xf32> -> vector<8x128xf32>
    %101 = arith.addf %98, %100 : vector<8x128xf32>
    %102 = arith.negf %101 : vector<8x128xf32>
    %103 = math.exp %102 : vector<8x128xf32>
    %cst_51 = arith.constant 1.000000e+00 : f32
    %104 = vector.broadcast %cst_51 : f32 to vector<8x128xf32>
    %105 = arith.addf %104, %103 : vector<8x128xf32>
    %106 = arith.divf %104, %105 : vector<8x128xf32>
    %107 = math.tanh %101 : vector<8x128xf32>
    %108 = vector.extract_strided_slice %106 {offsets = [0, 0], sizes = [8, 32], strides = [1, 1]} : vector<8x128xf32> to vector<8x32xf32>
    %109 = vector.extract_strided_slice %106 {offsets = [0, 32], sizes = [8, 32], strides = [1, 1]} : vector<8x128xf32> to vector<8x32xf32>
    %110 = vector.extract_strided_slice %106 {offsets = [0, 96], sizes = [8, 32], strides = [1, 1]} : vector<8x128xf32> to vector<8x32xf32>
    %111 = vector.extract_strided_slice %107 {offsets = [0, 64], sizes = [8, 32], strides = [1, 1]} : vector<8x128xf32> to vector<8x32xf32>
    %112 = arith.mulf %109, %90 : vector<8x32xf32>
    %113 = arith.mulf %108, %111 : vector<8x32xf32>
    %114 = arith.addf %112, %113 : vector<8x32xf32>
    %115 = math.tanh %114 : vector<8x32xf32>
    %116 = arith.mulf %110, %115 : vector<8x32xf32>
    %117 = arith.index_cast %96 : i32 to index
    %c0_52 = arith.constant 0 : index
    %118 = vector.load %arg15[%117, %c0_52] : memref<64x32xf32, #tpu.memory_space<vmem>>, vector<8x32xf32>
    tpu.vector_store %arg15[%117, %c0_52], %116 {strides = array<i32>} : memref<64x32xf32, #tpu.memory_space<vmem>>, vector<8x32xf32>,
    %c3_i32 = arith.constant 3 : i32
    %c8_i32_53 = arith.constant 8 : i32
    %119 = arith.muli %c3_i32, %c8_i32_53 : i32
    %120 = tpu.assume_multiple %119, 8 : i32
    %121 = arith.index_cast %120 : i32 to index
    %c0_54 = arith.constant 0 : index
    %122 = vector.load %arg14[%121, %c0_54] : memref<64x128xf32, #tpu.memory_space<vmem>>, vector<8x128xf32>
    %123 = arith.truncf %116 : vector<8x32xf32> to vector<8x32xbf16>
    %cst_55 = arith.constant dense<0.000000e+00> : vector<8x128xf32>
    %124 = tpu.matmul %123, %44, %cst_55 {dimension_numbers = #tpu.dot_dimension_numbers<[1], [0], [0], [1], [0, 0, 1, 1], [], []>} : vector<8x32xbf16>, vector<32x128xbf16>, vector<8x128xf32> -> vector<8x128xf32>
    %125 = arith.addf %122, %124 : vector<8x128xf32>
    %126 = arith.negf %125 : vector<8x128xf32>
    %127 = math.exp %126 : vector<8x128xf32>
    %cst_56 = arith.constant 1.000000e+00 : f32
    %128 = vector.broadcast %cst_56 : f32 to vector<8x128xf32>
    %129 = arith.addf %128, %127 : vector<8x128xf32>
    %130 = arith.divf %128, %129 : vector<8x128xf32>
    %131 = math.tanh %125 : vector<8x128xf32>
    %132 = vector.extract_strided_slice %130 {offsets = [0, 0], sizes = [8, 32], strides = [1, 1]} : vector<8x128xf32> to vector<8x32xf32>
    %133 = vector.extract_strided_slice %130 {offsets = [0, 32], sizes = [8, 32], strides = [1, 1]} : vector<8x128xf32> to vector<8x32xf32>
    %134 = vector.extract_strided_slice %130 {offsets = [0, 96], sizes = [8, 32], strides = [1, 1]} : vector<8x128xf32> to vector<8x32xf32>
    %135 = vector.extract_strided_slice %131 {offsets = [0, 64], sizes = [8, 32], strides = [1, 1]} : vector<8x128xf32> to vector<8x32xf32>
    %136 = arith.mulf %133, %114 : vector<8x32xf32>
    %137 = arith.mulf %132, %135 : vector<8x32xf32>
    %138 = arith.addf %136, %137 : vector<8x32xf32>
    %139 = math.tanh %138 : vector<8x32xf32>
    %140 = arith.mulf %134, %139 : vector<8x32xf32>
    %141 = arith.index_cast %120 : i32 to index
    %c0_57 = arith.constant 0 : index
    %142 = vector.load %arg15[%141, %c0_57] : memref<64x32xf32, #tpu.memory_space<vmem>>, vector<8x32xf32>
    tpu.vector_store %arg15[%141, %c0_57], %140 {strides = array<i32>} : memref<64x32xf32, #tpu.memory_space<vmem>>, vector<8x32xf32>,
    %c4_i32 = arith.constant 4 : i32
    %c8_i32_58 = arith.constant 8 : i32
    %143 = arith.muli %c4_i32, %c8_i32_58 : i32
    %144 = tpu.assume_multiple %143, 8 : i32
    %145 = arith.index_cast %144 : i32 to index
    %c0_59 = arith.constant 0 : index
    %146 = vector.load %arg14[%145, %c0_59] : memref<64x128xf32, #tpu.memory_space<vmem>>, vector<8x128xf32>
    %147 = arith.truncf %140 : vector<8x32xf32> to vector<8x32xbf16>
    %cst_60 = arith.constant dense<0.000000e+00> : vector<8x128xf32>
    %148 = tpu.matmul %147, %44, %cst_60 {dimension_numbers = #tpu.dot_dimension_numbers<[1], [0], [0], [1], [0, 0, 1, 1], [], []>} : vector<8x32xbf16>, vector<32x128xbf16>, vector<8x128xf32> -> vector<8x128xf32>
    %149 = arith.addf %146, %148 : vector<8x128xf32>
    %150 = arith.negf %149 : vector<8x128xf32>
    %151 = math.exp %150 : vector<8x128xf32>
    %cst_61 = arith.constant 1.000000e+00 : f32
    %152 = vector.broadcast %cst_61 : f32 to vector<8x128xf32>
    %153 = arith.addf %152, %151 : vector<8x128xf32>
    %154 = arith.divf %152, %153 : vector<8x128xf32>
    %155 = math.tanh %149 : vector<8x128xf32>
    %156 = vector.extract_strided_slice %154 {offsets = [0, 0], sizes = [8, 32], strides = [1, 1]} : vector<8x128xf32> to vector<8x32xf32>
    %157 = vector.extract_strided_slice %154 {offsets = [0, 32], sizes = [8, 32], strides = [1, 1]} : vector<8x128xf32> to vector<8x32xf32>
    %158 = vector.extract_strided_slice %154 {offsets = [0, 96], sizes = [8, 32], strides = [1, 1]} : vector<8x128xf32> to vector<8x32xf32>
    %159 = vector.extract_strided_slice %155 {offsets = [0, 64], sizes = [8, 32], strides = [1, 1]} : vector<8x128xf32> to vector<8x32xf32>
    %160 = arith.mulf %157, %138 : vector<8x32xf32>
    %161 = arith.mulf %156, %159 : vector<8x32xf32>
    %162 = arith.addf %160, %161 : vector<8x32xf32>
    %163 = math.tanh %162 : vector<8x32xf32>
    %164 = arith.mulf %158, %163 : vector<8x32xf32>
    %165 = arith.index_cast %144 : i32 to index
    %c0_62 = arith.constant 0 : index
    %166 = vector.load %arg15[%165, %c0_62] : memref<64x32xf32, #tpu.memory_space<vmem>>, vector<8x32xf32>
    tpu.vector_store %arg15[%165, %c0_62], %164 {strides = array<i32>} : memref<64x32xf32, #tpu.memory_space<vmem>>, vector<8x32xf32>,
    %c5_i32 = arith.constant 5 : i32
    %c8_i32_63 = arith.constant 8 : i32
    %167 = arith.muli %c5_i32, %c8_i32_63 : i32
    %168 = tpu.assume_multiple %167, 8 : i32
    %169 = arith.index_cast %168 : i32 to index
    %c0_64 = arith.constant 0 : index
    %170 = vector.load %arg14[%169, %c0_64] : memref<64x128xf32, #tpu.memory_space<vmem>>, vector<8x128xf32>
    %171 = arith.truncf %164 : vector<8x32xf32> to vector<8x32xbf16>
    %cst_65 = arith.constant dense<0.000000e+00> : vector<8x128xf32>
    %172 = tpu.matmul %171, %44, %cst_65 {dimension_numbers = #tpu.dot_dimension_numbers<[1], [0], [0], [1], [0, 0, 1, 1], [], []>} : vector<8x32xbf16>, vector<32x128xbf16>, vector<8x128xf32> -> vector<8x128xf32>
    %173 = arith.addf %170, %172 : vector<8x128xf32>
    %174 = arith.negf %173 : vector<8x128xf32>
    %175 = math.exp %174 : vector<8x128xf32>
    %cst_66 = arith.constant 1.000000e+00 : f32
    %176 = vector.broadcast %cst_66 : f32 to vector<8x128xf32>
    %177 = arith.addf %176, %175 : vector<8x128xf32>
    %178 = arith.divf %176, %177 : vector<8x128xf32>
    %179 = math.tanh %173 : vector<8x128xf32>
    %180 = vector.extract_strided_slice %178 {offsets = [0, 0], sizes = [8, 32], strides = [1, 1]} : vector<8x128xf32> to vector<8x32xf32>
    %181 = vector.extract_strided_slice %178 {offsets = [0, 32], sizes = [8, 32], strides = [1, 1]} : vector<8x128xf32> to vector<8x32xf32>
    %182 = vector.extract_strided_slice %178 {offsets = [0, 96], sizes = [8, 32], strides = [1, 1]} : vector<8x128xf32> to vector<8x32xf32>
    %183 = vector.extract_strided_slice %179 {offsets = [0, 64], sizes = [8, 32], strides = [1, 1]} : vector<8x128xf32> to vector<8x32xf32>
    %184 = arith.mulf %181, %162 : vector<8x32xf32>
    %185 = arith.mulf %180, %183 : vector<8x32xf32>
    %186 = arith.addf %184, %185 : vector<8x32xf32>
    %187 = math.tanh %186 : vector<8x32xf32>
    %188 = arith.mulf %182, %187 : vector<8x32xf32>
    %189 = arith.index_cast %168 : i32 to index
    %c0_67 = arith.constant 0 : index
    %190 = vector.load %arg15[%189, %c0_67] : memref<64x32xf32, #tpu.memory_space<vmem>>, vector<8x32xf32>
    tpu.vector_store %arg15[%189, %c0_67], %188 {strides = array<i32>} : memref<64x32xf32, #tpu.memory_space<vmem>>, vector<8x32xf32>,
    %c6_i32 = arith.constant 6 : i32
    %c8_i32_68 = arith.constant 8 : i32
    %191 = arith.muli %c6_i32, %c8_i32_68 : i32
    %192 = tpu.assume_multiple %191, 8 : i32
    %193 = arith.index_cast %192 : i32 to index
    %c0_69 = arith.constant 0 : index
    %194 = vector.load %arg14[%193, %c0_69] : memref<64x128xf32, #tpu.memory_space<vmem>>, vector<8x128xf32>
    %195 = arith.truncf %188 : vector<8x32xf32> to vector<8x32xbf16>
    %cst_70 = arith.constant dense<0.000000e+00> : vector<8x128xf32>
    %196 = tpu.matmul %195, %44, %cst_70 {dimension_numbers = #tpu.dot_dimension_numbers<[1], [0], [0], [1], [0, 0, 1, 1], [], []>} : vector<8x32xbf16>, vector<32x128xbf16>, vector<8x128xf32> -> vector<8x128xf32>
    %197 = arith.addf %194, %196 : vector<8x128xf32>
    %198 = arith.negf %197 : vector<8x128xf32>
    %199 = math.exp %198 : vector<8x128xf32>
    %cst_71 = arith.constant 1.000000e+00 : f32
    %200 = vector.broadcast %cst_71 : f32 to vector<8x128xf32>
    %201 = arith.addf %200, %199 : vector<8x128xf32>
    %202 = arith.divf %200, %201 : vector<8x128xf32>
    %203 = math.tanh %197 : vector<8x128xf32>
    %204 = vector.extract_strided_slice %202 {offsets = [0, 0], sizes = [8, 32], strides = [1, 1]} : vector<8x128xf32> to vector<8x32xf32>
    %205 = vector.extract_strided_slice %202 {offsets = [0, 32], sizes = [8, 32], strides = [1, 1]} : vector<8x128xf32> to vector<8x32xf32>
    %206 = vector.extract_strided_slice %202 {offsets = [0, 96], sizes = [8, 32], strides = [1, 1]} : vector<8x128xf32> to vector<8x32xf32>
    %207 = vector.extract_strided_slice %203 {offsets = [0, 64], sizes = [8, 32], strides = [1, 1]} : vector<8x128xf32> to vector<8x32xf32>
    %208 = arith.mulf %205, %186 : vector<8x32xf32>
    %209 = arith.mulf %204, %207 : vector<8x32xf32>
    %210 = arith.addf %208, %209 : vector<8x32xf32>
    %211 = math.tanh %210 : vector<8x32xf32>
    %212 = arith.mulf %206, %211 : vector<8x32xf32>
    %213 = arith.index_cast %192 : i32 to index
    %c0_72 = arith.constant 0 : index
    %214 = vector.load %arg15[%213, %c0_72] : memref<64x32xf32, #tpu.memory_space<vmem>>, vector<8x32xf32>
    tpu.vector_store %arg15[%213, %c0_72], %212 {strides = array<i32>} : memref<64x32xf32, #tpu.memory_space<vmem>>, vector<8x32xf32>,
    %c7_i32 = arith.constant 7 : i32
    %c8_i32_73 = arith.constant 8 : i32
    %215 = arith.muli %c7_i32, %c8_i32_73 : i32
    %216 = tpu.assume_multiple %215, 8 : i32
    %217 = arith.index_cast %216 : i32 to index
    %c0_74 = arith.constant 0 : index
    %218 = vector.load %arg14[%217, %c0_74] : memref<64x128xf32, #tpu.memory_space<vmem>>, vector<8x128xf32>
    %219 = arith.truncf %212 : vector<8x32xf32> to vector<8x32xbf16>
    %cst_75 = arith.constant dense<0.000000e+00> : vector<8x128xf32>
    %220 = tpu.matmul %219, %44, %cst_75 {dimension_numbers = #tpu.dot_dimension_numbers<[1], [0], [0], [1], [0, 0, 1, 1], [], []>} : vector<8x32xbf16>, vector<32x128xbf16>, vector<8x128xf32> -> vector<8x128xf32>
    %221 = arith.addf %218, %220 : vector<8x128xf32>
    %222 = arith.negf %221 : vector<8x128xf32>
    %223 = math.exp %222 : vector<8x128xf32>
    %cst_76 = arith.constant 1.000000e+00 : f32
    %224 = vector.broadcast %cst_76 : f32 to vector<8x128xf32>
    %225 = arith.addf %224, %223 : vector<8x128xf32>
    %226 = arith.divf %224, %225 : vector<8x128xf32>
    %227 = math.tanh %221 : vector<8x128xf32>
    %228 = vector.extract_strided_slice %226 {offsets = [0, 0], sizes = [8, 32], strides = [1, 1]} : vector<8x128xf32> to vector<8x32xf32>
    %229 = vector.extract_strided_slice %226 {offsets = [0, 32], sizes = [8, 32], strides = [1, 1]} : vector<8x128xf32> to vector<8x32xf32>
    %230 = vector.extract_strided_slice %226 {offsets = [0, 96], sizes = [8, 32], strides = [1, 1]} : vector<8x128xf32> to vector<8x32xf32>
    %231 = vector.extract_strided_slice %227 {offsets = [0, 64], sizes = [8, 32], strides = [1, 1]} : vector<8x128xf32> to vector<8x32xf32>
    %232 = arith.mulf %229, %210 : vector<8x32xf32>
    %233 = arith.mulf %228, %231 : vector<8x32xf32>
    %234 = arith.addf %232, %233 : vector<8x32xf32>
    %235 = math.tanh %234 : vector<8x32xf32>
    %236 = arith.mulf %230, %235 : vector<8x32xf32>
    %237 = arith.index_cast %216 : i32 to index
    %c0_77 = arith.constant 0 : index
    %238 = vector.load %arg15[%237, %c0_77] : memref<64x32xf32, #tpu.memory_space<vmem>>, vector<8x32xf32>
    tpu.vector_store %arg15[%237, %c0_77], %236 {strides = array<i32>} : memref<64x32xf32, #tpu.memory_space<vmem>>, vector<8x32xf32>,
    %c8_i32_78 = arith.constant 8 : i32
    %c0_79 = arith.constant 0 : index
    %c0_80 = arith.constant 0 : index
    %239 = vector.load %arg15[%c0_79, %c0_80] : memref<64x32xf32, #tpu.memory_space<vmem>>, vector<64x32xf32>
    %240 = arith.truncf %239 : vector<64x32xf32> to vector<64x32xbf16>
    %c0_81 = arith.constant 0 : index
    %c0_82 = arith.constant 0 : index
    %241 = vector.load %arg10[%c0_81, %c0_82] : memref<32x32xbf16, #tpu.memory_space<vmem>>, vector<32x32xbf16>
    %cst_83 = arith.constant dense<0.000000e+00> : vector<64x32xf32>
    %242 = tpu.matmul %240, %241, %cst_83 {dimension_numbers = #tpu.dot_dimension_numbers<[1], [0], [0], [1], [0, 0, 1, 1], [], []>} : vector<64x32xbf16>, vector<32x32xbf16>, vector<64x32xf32> -> vector<64x32xf32>
    %c0_84 = arith.constant 0 : index
    %c0_85 = arith.constant 0 : index
    %243 = vector.load %arg11[%c0_84, %c0_85] : memref<1x32xf32, #tpu.memory_space<vmem>>, vector<1x32xf32>
    %244 = vector.broadcast %243 : vector<1x32xf32> to vector<64x32xf32>
    %245 = arith.addf %242, %244 : vector<64x32xf32>
    %cst_86 = arith.constant 0.000000e+00 : f32
    %246 = vector.broadcast %cst_86 : f32 to vector<64x32xf32>
    %247 = arith.maximumf %245, %246 : vector<64x32xf32>
    %248 = arith.truncf %247 : vector<64x32xf32> to vector<64x32xbf16>
    %c0_87 = arith.constant 0 : index
    %c0_88 = arith.constant 0 : index
    %249 = vector.load %arg12[%c0_87, %c0_88] : memref<32x16xbf16, #tpu.memory_space<vmem>>, vector<32x16xbf16>
    %cst_89 = arith.constant dense<0.000000e+00> : vector<64x16xf32>
    %250 = tpu.matmul %248, %249, %cst_89 {dimension_numbers = #tpu.dot_dimension_numbers<[1], [0], [0], [1], [0, 0, 1, 1], [], []>} : vector<64x32xbf16>, vector<32x16xbf16>, vector<64x16xf32> -> vector<64x16xf32>
    %c0_90 = arith.constant 0 : index
    %c0_91 = arith.constant 0 : index
    %251 = vector.load %arg13[%c0_90, %c0_91] : memref<64x16xf32, #tpu.memory_space<vmem>>, vector<64x16xf32>
    tpu.vector_store %arg13[%c0_90, %c0_91], %250 {strides = array<i32>} : memref<64x16xf32, #tpu.memory_space<vmem>>, vector<64x16xf32>,
    return
  }
}

</mosaic_0001>

<llo_original>
// kernel: tpu_custom_call.1
$region0: #{tpu_custom_call.1}
  #allocation0 [shape = 'u32[]', space=smem, size = 0x4, offset = 0x4, fixed_abs, tag = 'smem constant byte address 0x4 - core index']
  #allocation1 [shape = 'u32[144,128]{1,0:T(1,128)}', space=vmem, size = 0x12000, scoped, tag = 'internal scratch']
  #allocation2 [shape = 'f32[64,128]{1,0:T(8,128)}', space=vmem, size = 0x8000, scoped, tag = 'scratch operand']
  #allocation3 [shape = 'f32[64,32]{1,0:T(8,128)}', space=vmem, size = 0x8000, scoped, tag = 'scratch operand']
  %s0 = inlined_call_operand.vmem [shape: bf16[80,16], index: 0, kind: input, shape index: {}]
  %s1 = inlined_call_operand.vmem [shape: bf16[3,16,32], index: 1, kind: input, shape index: {}]
  %s2 = inlined_call_operand.vmem [shape: f32[1,32], index: 2, kind: input, shape index: {}]
  %s3 = inlined_call_operand.vmem [shape: bf16[32,32], index: 3, kind: input, shape index: {}]
  %s4 = inlined_call_operand.hbm [shape: f32[1,32], index: 4, kind: input, shape index: {}]
  %s5 = inlined_call_operand.vmem [shape: bf16[32,32], index: 5, kind: input, shape index: {}]
  %s6 = inlined_call_operand.hbm [shape: f32[1,32], index: 6, kind: input, shape index: {}]
  %s7 = inlined_call_operand.vmem [shape: bf16[32,128], index: 7, kind: input, shape index: {}]
  %s8 = inlined_call_operand.vmem [shape: bf16[32,128], index: 8, kind: input, shape index: {}]
  %s9 = inlined_call_operand.hbm [shape: f32[1,128], index: 9, kind: input, shape index: {}]
  %s10 = inlined_call_operand.vmem [shape: bf16[32,32], index: 10, kind: input, shape index: {}]
  %s11 = inlined_call_operand.hbm [shape: f32[1,32], index: 11, kind: input, shape index: {}]
  %s12 = inlined_call_operand.vmem [shape: bf16[32,16], index: 12, kind: input, shape index: {}]
  %s13 = inlined_call_operand.vmem [shape: f32[64,16], index: 13, kind: output, shape index: {}]
  %s14 = sld [smem:[#allocation0]]
  $region78: #{tpu_custom_call.1} parent=0
    _
  %s16 = ssub.s32 1, %s14
  %s17 = scalar_select 0, %s16, %s14
  $region1: #{tpu_custom_call.1} parent=0
    #allocation4 [shape = 'u8[512]{0}', space=vmem, size = 0x400, scoped, tag = 'input window, operand 4, single buffered']
    #allocation5 [shape = 's32[1]{0}', space=sflag, size = 0x4, scoped, tag = 'scoped memory for tpu_custom_call.1']
    #allocation6 [shape = 'u8[512]{0}', space=vmem, size = 0x400, scoped, tag = 'input window, operand 6, single buffered']
    #allocation7 [shape = 's32[1]{0}', space=sflag, size = 0x4, scoped, tag = 'scoped memory for tpu_custom_call.1']
    #allocation8 [shape = 'u8[512]{0}', space=vmem, size = 0x400, scoped, tag = 'input window, operand 9, single buffered']
    #allocation9 [shape = 'u8[512]{0}', space=vmem, size = 0x400, scoped, tag = 'input window, operand 11, single buffered']
    #allocation10 [shape = 's32[1]{0}', space=sflag, size = 0x4, scoped, tag = 'scoped memory for tpu_custom_call.1']
    %18 = vsyncpa [#allocation5], 0
    %19 = vsyncpa [#allocation7], 0
    %20 = vsyncpa [#allocation10], 0
    // Predicated region
    $region2: #{tpu_custom_call.1} parent=1 // pred_check
      _
    $region3: #{tpu_custom_call.1} parent=1 // pred_check_branch
      %22 = sbr.rel (0) target = $region5
    $region4: #{tpu_custom_call.1} parent=1 // pred_region
      _
    $region5: #{tpu_custom_call.1} parent=1 // pred_fallthru
      _
    // Predicated region
    $region6: #{tpu_custom_call.1} parent=1 // pred_check
      _
    $region7: #{tpu_custom_call.1} parent=1 // pred_check_branch
      %24 = sbr.rel (0) target = $region9
    $region8: #{tpu_custom_call.1} parent=1 // pred_region
      _
    $region9: #{tpu_custom_call.1} parent=1 // pred_fallthru
      _
    // Predicated region
    $region10: #{tpu_custom_call.1} parent=1 // pred_check
      _
    $region11: #{tpu_custom_call.1} parent=1 // pred_check_branch
      %26 = sbr.rel (0) target = $region13
    $region12: #{tpu_custom_call.1} parent=1 // pred_region
      _
    $region13: #{tpu_custom_call.1} parent=1 // pred_fallthru
      _
    // Predicated region
    $region14: #{tpu_custom_call.1} parent=1 // pred_check
      _
    $region15: #{tpu_custom_call.1} parent=1 // pred_check_branch
      %28 = sbr.rel (0) target = $region17
    $region16: #{tpu_custom_call.1} parent=1 // pred_region
      _
    $region17: #{tpu_custom_call.1} parent=1 // pred_fallthru
      _
    // Predicated region
    $region18: #{tpu_custom_call.1} parent=1 // pred_check
      _
    $region19: #{tpu_custom_call.1} parent=1 // pred_check_branch
      %30 = sbr.rel (0) target = $region21
    $region20: #{tpu_custom_call.1} parent=1 // pred_region
      %s32 = ssub.s32 16, 16
      %33 = vsyncadd [#allocation5], %s32
      %s35 = sshll.u32 [#allocation4], 4
      %s36 = int_to_ptr.vmem [resolvable:$true] %s35
      %38 = dma.hbm_to_vmem [thread:$0]  %s4, 16, %s36, [#allocation5]
    $region21: #{tpu_custom_call.1} parent=1 // pred_fallthru
      _
    // Predicated region
    $region22: #{tpu_custom_call.1} parent=1 // pred_check
      _
    $region23: #{tpu_custom_call.1} parent=1 // pred_check_branch
      %40 = sbr.rel (0) target = $region25
    $region24: #{tpu_custom_call.1} parent=1 // pred_region
      _
    $region25: #{tpu_custom_call.1} parent=1 // pred_fallthru
      _
    // Predicated region
    $region26: #{tpu_custom_call.1} parent=1 // pred_check
      _
    $region27: #{tpu_custom_call.1} parent=1 // pred_check_branch
      %42 = sbr.rel (0) target = $region29
    $region28: #{tpu_custom_call.1} parent=1 // pred_region
      %s44 = ssub.s32 16, 16
      %45 = vsyncadd [#allocation7], %s44
      %s47 = sshll.u32 [#allocation6], 4
      %s48 = int_to_ptr.vmem [resolvable:$true] %s47
      %50 = dma.hbm_to_vmem [thread:$0]  %s6, 16, %s48, [#allocation7]
    $region29: #{tpu_custom_call.1} parent=1 // pred_fallthru
      _
    // Predicated region
    $region30: #{tpu_custom_call.1} parent=1 // pred_check
      _
    $region31: #{tpu_custom_call.1} parent=1 // pred_check_branch
      %52 = sbr.rel (0) target = $region33
    $region32: #{tpu_custom_call.1} parent=1 // pred_region
      _
    $region33: #{tpu_custom_call.1} parent=1 // pred_fallthru
      _
    // Predicated region
    $region34: #{tpu_custom_call.1} parent=1 // pred_check
      _
    $region35: #{tpu_custom_call.1} parent=1 // pred_check_branch
      %54 = sbr.rel (0) target = $region37
    $region36: #{tpu_custom_call.1} parent=1 // pred_region
      _
    $region37: #{tpu_custom_call.1} parent=1 // pred_fallthru
      _
    // Predicated region
    $region38: #{tpu_custom_call.1} parent=1 // pred_check
      _
    $region39: #{tpu_custom_call.1} parent=1 // pred_check_branch
      %56 = sbr.rel (0) target = $region41
    $region40: #{tpu_custom_call.1} parent=1 // pred_region
      %s58 = ssub.s32 16, 16
      %59 = vsyncadd [#allocation7], %s58
      %s61 = sshll.u32 [#allocation8], 4
      %s62 = int_to_ptr.vmem [resolvable:$true] %s61
      %64 = dma.hbm_to_vmem [thread:$0]  %s9, 16, %s62, [#allocation7]
    $region41: #{tpu_custom_call.1} parent=1 // pred_fallthru
      _
    // Predicated region
    $region42: #{tpu_custom_call.1} parent=1 // pred_check
      _
    $region43: #{tpu_custom_call.1} parent=1 // pred_check_branch
      %66 = sbr.rel (0) target = $region45
    $region44: #{tpu_custom_call.1} parent=1 // pred_region
      _
    $region45: #{tpu_custom_call.1} parent=1 // pred_fallthru
      _
    // Predicated region
    $region46: #{tpu_custom_call.1} parent=1 // pred_check
      _
    $region47: #{tpu_custom_call.1} parent=1 // pred_check_branch
      %68 = sbr.rel (0) target = $region49
    $region48: #{tpu_custom_call.1} parent=1 // pred_region
      %s70 = ssub.s32 16, 16
      %71 = vsyncadd [#allocation10], %s70
      %s73 = sshll.u32 [#allocation9], 4
      %s74 = int_to_ptr.vmem [resolvable:$true] %s73
      %76 = dma.hbm_to_vmem [thread:$0]  %s11, 16, %s74, [#allocation10]
    $region49: #{tpu_custom_call.1} parent=1 // pred_fallthru
      _
    // Predicated region
    $region50: #{tpu_custom_call.1} parent=1 // pred_check
      _
    $region51: #{tpu_custom_call.1} parent=1 // pred_check_branch
      %78 = sbr.rel (0) target = $region53
    $region52: #{tpu_custom_call.1} parent=1 // pred_region
      _
    $region53: #{tpu_custom_call.1} parent=1 // pred_fallthru
      _
    // Predicated region
    $region54: #{tpu_custom_call.1} parent=1 // pred_check
      _
    $region55: #{tpu_custom_call.1} parent=1 // pred_check_branch
      %80 = sbr.rel (0) target = $region57
    $region56: #{tpu_custom_call.1} parent=1 // pred_region
      %81 = dma.done [#allocation5], 16
    $region57: #{tpu_custom_call.1} parent=1 // pred_fallthru
      _
    // Predicated region
    $region58: #{tpu_custom_call.1} parent=1 // pred_check
      _
    $region59: #{tpu_custom_call.1} parent=1 // pred_check_branch
      %83 = sbr.rel (0) target = $region61
    $region60: #{tpu_custom_call.1} parent=1 // pred_region
      %84 = dma.done [#allocation7], 16
    $region61: #{tpu_custom_call.1} parent=1 // pred_fallthru
      _
    // Predicated region
    $region62: #{tpu_custom_call.1} parent=1 // pred_check
      _
    $region63: #{tpu_custom_call.1} parent=1 // pred_check_branch
      %86 = sbr.rel (0) target = $region65
    $region64: #{tpu_custom_call.1} parent=1 // pred_region
      %87 = dma.done [#allocation7], 16
    $region65: #{tpu_custom_call.1} parent=1 // pred_fallthru
      _
    // Predicated region
    $region66: #{tpu_custom_call.1} parent=1 // pred_check
      _
    $region67: #{tpu_custom_call.1} parent=1 // pred_check_branch
      %89 = sbr.rel (0) target = $region69
    $region68: #{tpu_custom_call.1} parent=1 // pred_region
      %90 = dma.done [#allocation10], 16
    $region69: #{tpu_custom_call.1} parent=1 // pred_fallthru
      _
    %v92 = vld [vmem:[%s0] sm:$0xf]
    %v93 = vld [vmem:[%s0 + $0x4] sm:$0xf]
    %v94 = vld [vmem:[%s0 + $0x8] sm:$0xf]
    %v95 = vld [vmem:[%s0 + $0xc] sm:$0xf]
    %v96 = vld [vmem:[%s0 + $0x10] sm:$0xf]
    %v97 = vld [vmem:[%s0 + $0x14] sm:$0xf]
    %v98 = vld [vmem:[%s0 + $0x18] sm:$0xf]
    %v99 = vld [vmem:[%s0 + $0x1c] sm:$0xf]
    %v100 = vld [vmem:[%s1] sm:$0xf]
    %v101 = vld [vmem:[%s1 + $0x4] sm:$0xf]
    %v102 = vld [vmem:[%s0 + $0x20] sm:$0xf]
    %s103 = scalar_lea.vmem %s1, 8
    %v104 = vld [vmem:[%s103] sm:$0xf]
    %v105 = vld [vmem:[%s103 + $0x4] sm:$0xf]
    %v114 = vunpack.c.l.b16 %v93
    %v115 = vunpack.c.l.b16 %v94
    %v116 = vunpack.c.l.b16 %v95
    %v117 = vunpack.c.l.b16 %v96
    %v118 = vunpack.c.l.b16 %v97
    %v119 = vunpack.c.l.b16 %v98
    %v120 = vunpack.c.l.b16 %v99
    %v121 = vunpack.c.l.b16 %v102
    %v122 = vpack.c.b16 %v115, %v114
    %v123 = vpack.c.b16 %v117, %v116
    %v124 = vpack.c.b16 %v119, %v118
    %v125 = vpack.c.b16 %v121, %v120
    %v128 = vunpack.c.l.b16 %v104
    %v129 = vunpack.c.l.b16 %v105
    %v130 = vpack.c.b16 %v129, %v128
    %vm132 = vcmask 130048
    %v134 = vsel %vm132, %v122, 0
    %v137 = vsel %vm132, %v123, 0
    %v140 = vsel %vm132, %v124, 0
    %v143 = vsel %vm132, %v125, 0
    %145 = vmatprep.subr.bf16.mxu0 0
    %146 = vmatpush1.bf16.msra.mxu0 %v130
    %147 = vmatprep.subr.bf16.mxu0 0
    %148 = vmatpush1.bf16.msra.mxu0 0
    %149 = vmatprep.subr.bf16.mxu0 0
    %150 = vmatpush1.bf16.msra.mxu0 0
    %151 = vmatprep.subr.bf16.mxu0 0
    %152 = vmatpush1.bf16.msra.mxu0 0
    %153 = vmatprep.subr.bf16.mxu0 0
    %154 = vmatpush1.bf16.msra.mxu0 0
    %155 = vmatprep.subr.bf16.mxu0 0
    %156 = vmatpush1.bf16.msra.mxu0 0
    %157 = vmatprep.subr.bf16.mxu0 0
    %158 = vmatpush1.bf16.msra.mxu0 0
    %159 = vmatprep.subr.bf16.mxu0 0
    %160 = vmatpush1.bf16.msra.mxu0 0
    %161 = vmatprep.subr.bf16.mxu0 0
    %162 = vmatpush1.bf16.msra.mxu0 0
    %163 = vmatprep.subr.bf16.mxu0 0
    %164 = vmatpush1.bf16.msra.mxu0 0
    %165 = vmatprep.subr.bf16.mxu0 0
    %166 = vmatpush1.bf16.msra.mxu0 0
    %167 = vmatprep.subr.bf16.mxu0 0
    %168 = vmatpush1.bf16.msra.mxu0 0
    %169 = vmatprep.subr.bf16.mxu0 0
    %170 = vmatpush1.bf16.msra.mxu0 0
    %171 = vmatprep.subr.bf16.mxu0 0
    %172 = vmatpush1.bf16.msra.mxu0 0
    %173 = vmatprep.subr.bf16.mxu0 0
    %174 = vmatpush1.bf16.msra.mxu0 0
    %175 = vmatprep.subr.bf16.mxu0 0
    %176 = vmatpush1.bf16.msra.mxu0 0
    %177 = vmatprep.mubr.bf16.mxu0 0
    %178 = vmatmul.mubr.bf16.gmra.mrb[0].mxu0 %v134
    %v179 = vpop.f32.mrb[0].mxu0
    %v180 = vadd.f32 0.0, %v179
    %v181 = vpop.f32.mrb[0].mxu0
    %v182 = vpop.f32.mrb[0].mxu0
    %v183 = vadd.f32 0.0, %v182
    %v184 = vpop.f32.mrb[0].mxu0
    %185 = vmatprep.mubr.bf16.mxu0 0
    %186 = vmatmul.mubr.bf16.gmra.mrb[0].mxu0 %v137
    %v187 = vpop.f32.mrb[0].mxu0
    %v188 = vadd.f32 0.0, %v187
    %v189 = vpop.f32.mrb[0].mxu0
    %v190 = vpop.f32.mrb[0].mxu0
    %v191 = vadd.f32 0.0, %v190
    %v192 = vpop.f32.mrb[0].mxu0
    %193 = vmatprep.mubr.bf16.mxu0 0
    %194 = vmatmul.mubr.bf16.gmra.mrb[0].mxu0 %v140
    %v195 = vpop.f32.mrb[0].mxu0
    %v196 = vadd.f32 0.0, %v195
    %v197 = vpop.f32.mrb[0].mxu0
    %v198 = vpop.f32.mrb[0].mxu0
    %v199 = vadd.f32 0.0, %v198
    %v200 = vpop.f32.mrb[0].mxu0
    %201 = vmatprep.mubr.bf16.mxu0 0
    %202 = vmatmul.mubr.bf16.gmra.mrb[0].mxu0 %v143
    %v203 = vpop.f32.mrb[0].mxu0
    %v204 = vadd.f32 0.0, %v203
    %v205 = vpop.f32.mrb[0].mxu0
    %v206 = vpop.f32.mrb[0].mxu0
    %v207 = vadd.f32 0.0, %v206
    %v208 = vpop.f32.mrb[0].mxu0
    %209 = vdwg.mxu0
    %v211 = vunpack.c.l.b16 %v92
    %v212 = vpack.c.b16 %v114, %v211
    %v213 = vpack.c.b16 %v116, %v115
    %v214 = vpack.c.b16 %v118, %v117
    %v215 = vpack.c.b16 %v120, %v119
    %v218 = vunpack.c.l.b16 %v100
    %v219 = vunpack.c.l.b16 %v101
    %v220 = vpack.c.b16 %v219, %v218
    %v223 = vsel %vm132, %v212, 0
    %v226 = vsel %vm132, %v213, 0
    %v229 = vsel %vm132, %v214, 0
    %v232 = vsel %vm132, %v215, 0
    %234 = vmatprep.subr.bf16.mxu0 0
    %235 = vmatpush1.bf16.msra.mxu0 %v220
    %236 = vmatprep.subr.bf16.mxu0 0
    %237 = vmatpush1.bf16.msra.mxu0 0
    %238 = vmatprep.subr.bf16.mxu0 0
    %239 = vmatpush1.bf16.msra.mxu0 0
    %240 = vmatprep.subr.bf16.mxu0 0
    %241 = vmatpush1.bf16.msra.mxu0 0
    %242 = vmatprep.subr.bf16.mxu0 0
    %243 = vmatpush1.bf16.msra.mxu0 0
    %244 = vmatprep.subr.bf16.mxu0 0
    %245 = vmatpush1.bf16.msra.mxu0 0
    %246 = vmatprep.subr.bf16.mxu0 0
    %247 = vmatpush1.bf16.msra.mxu0 0
    %248 = vmatprep.subr.bf16.mxu0 0
    %249 = vmatpush1.bf16.msra.mxu0 0
    %250 = vmatprep.subr.bf16.mxu0 0
    %251 = vmatpush1.bf16.msra.mxu0 0
    %252 = vmatprep.subr.bf16.mxu0 0
    %253 = vmatpush1.bf16.msra.mxu0 0
    %254 = vmatprep.subr.bf16.mxu0 0
    %255 = vmatpush1.bf16.msra.mxu0 0
    %256 = vmatprep.subr.bf16.mxu0 0
    %257 = vmatpush1.bf16.msra.mxu0 0
    %258 = vmatprep.subr.bf16.mxu0 0
    %259 = vmatpush1.bf16.msra.mxu0 0
    %260 = vmatprep.subr.bf16.mxu0 0
    %261 = vmatpush1.bf16.msra.mxu0 0
    %262 = vmatprep.subr.bf16.mxu0 0
    %263 = vmatpush1.bf16.msra.mxu0 0
    %264 = vmatprep.subr.bf16.mxu0 0
    %265 = vmatpush1.bf16.msra.mxu0 0
    %266 = vmatprep.mubr.bf16.mxu0 0
    %267 = vmatmul.mubr.bf16.gmra.mrb[0].mxu0 %v223
    %v268 = vpop.f32.mrb[0].mxu0
    %v269 = vadd.f32 %v180, %v268
    %v270 = vpop.f32.mrb[0].mxu0
    %v271 = vpop.f32.mrb[0].mxu0
    %v272 = vadd.f32 %v183, %v271
    %v273 = vpop.f32.mrb[0].mxu0
    %274 = vmatprep.mubr.bf16.mxu0 0
    %275 = vmatmul.mubr.bf16.gmra.mrb[0].mxu0 %v226
    %v276 = vpop.f32.mrb[0].mxu0
    %v277 = vadd.f32 %v188, %v276
    %v278 = vpop.f32.mrb[0].mxu0
    %v279 = vpop.f32.mrb[0].mxu0
    %v280 = vadd.f32 %v191, %v279
    %v281 = vpop.f32.mrb[0].mxu0
    %282 = vmatprep.mubr.bf16.mxu0 0
    %283 = vmatmul.mubr.bf16.gmra.mrb[0].mxu0 %v229
    %v284 = vpop.f32.mrb[0].mxu0
    %v285 = vadd.f32 %v196, %v284
    %v286 = vpop.f32.mrb[0].mxu0
    %v287 = vpop.f32.mrb[0].mxu0
    %v288 = vadd.f32 %v199, %v287
    %v289 = vpop.f32.mrb[0].mxu0
    %290 = vmatprep.mubr.bf16.mxu0 0
    %291 = vmatmul.mubr.bf16.gmra.mrb[0].mxu0 %v232
    %v292 = vpop.f32.mrb[0].mxu0
    %v293 = vadd.f32 %v204, %v292
    %v294 = vpop.f32.mrb[0].mxu0
    %v295 = vpop.f32.mrb[0].mxu0
    %v296 = vadd.f32 %v207, %v295
    %v297 = vpop.f32.mrb[0].mxu0
    %298 = vdwg.mxu0
    %v299 = vld [vmem:[%s0 + $0x8] sm:$0xf]
    %v300 = vld [vmem:[%s0 + $0xc] sm:$0xf]
    %v301 = vld [vmem:[%s0 + $0x10] sm:$0xf]
    %v302 = vld [vmem:[%s0 + $0x14] sm:$0xf]
    %v303 = vld [vmem:[%s0 + $0x18] sm:$0xf]
    %v304 = vld [vmem:[%s0 + $0x1c] sm:$0xf]
    %v305 = vld [vmem:[%s0 + $0x20] sm:$0xf]
    %v306 = vld [vmem:[%s0 + $0x24] sm:$0xf]
    %s307 = scalar_lea.vmem %s1, 16
    %v308 = vld [vmem:[%s307] sm:$0xf]
    %v309 = vld [vmem:[%s307 + $0x4] sm:$0xf]
    %v318 = vunpack.c.l.b16 %v299
    %v319 = vunpack.c.l.b16 %v300
    %v320 = vunpack.c.l.b16 %v301
    %v321 = vunpack.c.l.b16 %v302
    %v322 = vunpack.c.l.b16 %v303
    %v323 = vunpack.c.l.b16 %v304
    %v324 = vunpack.c.l.b16 %v305
    %v325 = vunpack.c.l.b16 %v306
    %v326 = vpack.c.b16 %v319, %v318
    %v327 = vpack.c.b16 %v321, %v320
    %v328 = vpack.c.b16 %v323, %v322
    %v329 = vpack.c.b16 %v325, %v324
    %v332 = vunpack.c.l.b16 %v308
    %v333 = vunpack.c.l.b16 %v309
    %v334 = vpack.c.b16 %v333, %v332
    %v337 = vsel %vm132, %v326, 0
    %v340 = vsel %vm132, %v327, 0
    %v343 = vsel %vm132, %v328, 0
    %v346 = vsel %vm132, %v329, 0
    %348 = vmatprep.subr.bf16.mxu0 0
    %349 = vmatpush1.bf16.msra.mxu0 %v334
    %350 = vmatprep.subr.bf16.mxu0 0
    %351 = vmatpush1.bf16.msra.mxu0 0
    %352 = vmatprep.subr.bf16.mxu0 0
    %353 = vmatpush1.bf16.msra.mxu0 0
    %354 = vmatprep.subr.bf16.mxu0 0
    %355 = vmatpush1.bf16.msra.mxu0 0
    %356 = vmatprep.subr.bf16.mxu0 0
    %357 = vmatpush1.bf16.msra.mxu0 0
    %358 = vmatprep.subr.bf16.mxu0 0
    %359 = vmatpush1.bf16.msra.mxu0 0
    %360 = vmatprep.subr.bf16.mxu0 0
    %361 = vmatpush1.bf16.msra.mxu0 0
    %362 = vmatprep.subr.bf16.mxu0 0
    %363 = vmatpush1.bf16.msra.mxu0 0
    %364 = vmatprep.subr.bf16.mxu0 0
    %365 = vmatpush1.bf16.msra.mxu0 0
    %366 = vmatprep.subr.bf16.mxu0 0
    %367 = vmatpush1.bf16.msra.mxu0 0
    %368 = vmatprep.subr.bf16.mxu0 0
    %369 = vmatpush1.bf16.msra.mxu0 0
    %370 = vmatprep.subr.bf16.mxu0 0
    %371 = vmatpush1.bf16.msra.mxu0 0
    %372 = vmatprep.subr.bf16.mxu0 0
    %373 = vmatpush1.bf16.msra.mxu0 0
    %374 = vmatprep.subr.bf16.mxu0 0
    %375 = vmatpush1.bf16.msra.mxu0 0
    %376 = vmatprep.subr.bf16.mxu0 0
    %377 = vmatpush1.bf16.msra.mxu0 0
    %378 = vmatprep.subr.bf16.mxu0 0
    %379 = vmatpush1.bf16.msra.mxu0 0
    %380 = vmatprep.mubr.bf16.mxu0 0
    %381 = vmatmul.mubr.bf16.gmra.mrb[0].mxu0 %v337
    %v382 = vpop.f32.mrb[0].mxu0
    %v383 = vadd.f32 0.0, %v382
    %v384 = vpop.f32.mrb[0].mxu0
    %v385 = vpop.f32.mrb[0].mxu0
    %v386 = vadd.f32 0.0, %v385
    %v387 = vpop.f32.mrb[0].mxu0
    %388 = vmatprep.mubr.bf16.mxu0 0
    %389 = vmatmul.mubr.bf16.gmra.mrb[0].mxu0 %v340
    %v390 = vpop.f32.mrb[0].mxu0
    %v391 = vadd.f32 0.0, %v390
    %v392 = vpop.f32.mrb[0].mxu0
    %v393 = vpop.f32.mrb[0].mxu0
    %v394 = vadd.f32 0.0, %v393
    %v395 = vpop.f32.mrb[0].mxu0
    %396 = vmatprep.mubr.bf16.mxu0 0
    %397 = vmatmul.mubr.bf16.gmra.mrb[0].mxu0 %v343
    %v398 = vpop.f32.mrb[0].mxu0
    %v399 = vadd.f32 0.0, %v398
    %v400 = vpop.f32.mrb[0].mxu0
    %v401 = vpop.f32.mrb[0].mxu0
    %v402 = vadd.f32 0.0, %v401
    %v403 = vpop.f32.mrb[0].mxu0
    %404 = vmatprep.mubr.bf16.mxu0 0
    %405 = vmatmul.mubr.bf16.gmra.mrb[0].mxu0 %v346
    %v406 = vpop.f32.mrb[0].mxu0
    %v407 = vadd.f32 0.0, %v406
    %v408 = vpop.f32.mrb[0].mxu0
    %v409 = vpop.f32.mrb[0].mxu0
    %v410 = vadd.f32 0.0, %v409
    %v411 = vpop.f32.mrb[0].mxu0
    %412 = vdwg.mxu0
    %v413 = vadd.f32 %v269, %v383
    %v414 = vadd.f32 %v272, %v386
    %v415 = vadd.f32 %v277, %v391
    %v416 = vadd.f32 %v280, %v394
    %v417 = vadd.f32 %v285, %v399
    %v418 = vadd.f32 %v288, %v402
    %v419 = vadd.f32 %v293, %v407
    %v420 = vadd.f32 %v296, %v410
    %v421 = vld [vmem:[%s2] sm:$0x1]
    %v423 = vlaneseq
    %v424 = vshrl.u32 %v423, 7
    %v425 = vsub.s32 0, %v424
    %v426 = vrot.slane %v421, %v425
    %v428 = vadd.f32 %v413, %v426
    %v429 = vadd.f32 %v414, %v426
    %v430 = vadd.f32 %v415, %v426
    %v431 = vadd.f32 %v416, %v426
    %v432 = vadd.f32 %v417, %v426
    %v433 = vadd.f32 %v418, %v426
    %v434 = vadd.f32 %v419, %v426
    %v435 = vadd.f32 %v420, %v426
    %v436 = vmax.f32 %v428, 0.0
    %v437 = vmax.f32 %v429, 0.0
    %v438 = vmax.f32 %v430, 0.0
    %v439 = vmax.f32 %v431, 0.0
    %v440 = vmax.f32 %v432, 0.0
    %v441 = vmax.f32 %v433, 0.0
    %v442 = vmax.f32 %v434, 0.0
    %v443 = vmax.f32 %v435, 0.0
    %v444 = vpack.c.bf16 %v437, %v436
    %v445 = vpack.c.bf16 %v439, %v438
    %v446 = vpack.c.bf16 %v441, %v440
    %v447 = vpack.c.bf16 %v443, %v442
    %v448 = vld [vmem:[%s3] sm:$0xf]
    %v449 = vld [vmem:[%s3 + $0x4] sm:$0xf]
    %v450 = vld [vmem:[%s3 + $0x8] sm:$0xf]
    %v451 = vld [vmem:[%s3 + $0xc] sm:$0xf]
    %v452 = vld [vmem:[#allocation4] sm:$0x1]
    %v454 = vlaneseq
    %v455 = vshrl.u32 %v454, 7
    %v456 = vsub.s32 0, %v455
    %v457 = vrot.slane %v452, %v456
    %v463 = vunpack.c.l.b16 %v448
    %v464 = vunpack.c.l.b16 %v449
    %v465 = vunpack.c.l.b16 %v450
    %v466 = vunpack.c.l.b16 %v451
    %v467 = vpack.c.b16 %v464, %v463
    %v468 = vpack.c.b16 %v466, %v465
    %vm471 = vcmask 261120
    %v473 = vsel %vm471, %v444, 0
    %v476 = vsel %vm471, %v445, 0
    %v479 = vsel %vm471, %v446, 0
    %v482 = vsel %vm471, %v447, 0
    %484 = vmatprep.subr.bf16.mxu0 0
    %485 = vmatpush1.bf16.msra.mxu0 %v467
    %486 = vmatprep.subr.bf16.mxu0 0
    %487 = vmatpush1.bf16.msra.mxu0 %v468
    %488 = vmatprep.subr.bf16.mxu0 0
    %489 = vmatpush1.bf16.msra.mxu0 0
    %490 = vmatprep.subr.bf16.mxu0 0
    %491 = vmatpush1.bf16.msra.mxu0 0
    %492 = vmatprep.subr.bf16.mxu0 0
    %493 = vmatpush1.bf16.msra.mxu0 0
    %494 = vmatprep.subr.bf16.mxu0 0
    %495 = vmatpush1.bf16.msra.mxu0 0
    %496 = vmatprep.subr.bf16.mxu0 0
    %497 = vmatpush1.bf16.msra.mxu0 0
    %498 = vmatprep.subr.bf16.mxu0 0
    %499 = vmatpush1.bf16.msra.mxu0 0
    %500 = vmatprep.subr.bf16.mxu0 0
    %501 = vmatpush1.bf16.msra.mxu0 0
    %502 = vmatprep.subr.bf16.mxu0 0
    %503 = vmatpush1.bf16.msra.mxu0 0
    %504 = vmatprep.subr.bf16.mxu0 0
    %505 = vmatpush1.bf16.msra.mxu0 0
    %506 = vmatprep.subr.bf16.mxu0 0
    %507 = vmatpush1.bf16.msra.mxu0 0
    %508 = vmatprep.subr.bf16.mxu0 0
    %509 = vmatpush1.bf16.msra.mxu0 0
    %510 = vmatprep.subr.bf16.mxu0 0
    %511 = vmatpush1.bf16.msra.mxu0 0
    %512 = vmatprep.subr.bf16.mxu0 0
    %513 = vmatpush1.bf16.msra.mxu0 0
    %514 = vmatprep.subr.bf16.mxu0 0
    %515 = vmatpush1.bf16.msra.mxu0 0
    %516 = vmatprep.mubr.bf16.mxu0 0
    %517 = vmatmul.mubr.bf16.gmra.mrb[0].mxu0 %v473
    %v518 = vpop.f32.mrb[0].mxu0
    %v519 = vadd.f32 %v457, %v518
    %v520 = vpop.f32.mrb[0].mxu0
    %v521 = vpop.f32.mrb[0].mxu0
    %v522 = vadd.f32 %v457, %v521
    %v523 = vpop.f32.mrb[0].mxu0
    %524 = vmatprep.mubr.bf16.mxu0 0
    %525 = vmatmul.mubr.bf16.gmra.mrb[0].mxu0 %v476
    %v526 = vpop.f32.mrb[0].mxu0
    %v527 = vadd.f32 %v457, %v526
    %v528 = vpop.f32.mrb[0].mxu0
    %v529 = vpop.f32.mrb[0].mxu0
    %v530 = vadd.f32 %v457, %v529
    %v531 = vpop.f32.mrb[0].mxu0
    %532 = vmatprep.mubr.bf16.mxu0 0
    %533 = vmatmul.mubr.bf16.gmra.mrb[0].mxu0 %v479
    %v534 = vpop.f32.mrb[0].mxu0
    %v535 = vadd.f32 %v457, %v534
    %v536 = vpop.f32.mrb[0].mxu0
    %v537 = vpop.f32.mrb[0].mxu0
    %v538 = vadd.f32 %v457, %v537
    %v539 = vpop.f32.mrb[0].mxu0
    %540 = vmatprep.mubr.bf16.mxu0 0
    %541 = vmatmul.mubr.bf16.gmra.mrb[0].mxu0 %v482
    %v542 = vpop.f32.mrb[0].mxu0
    %v543 = vadd.f32 %v457, %v542
    %v544 = vpop.f32.mrb[0].mxu0
    %v545 = vpop.f32.mrb[0].mxu0
    %v546 = vadd.f32 %v457, %v545
    %v547 = vpop.f32.mrb[0].mxu0
    %548 = vdwg.mxu0
    %v549 = vmax.f32 %v519, 0.0
    %v550 = vmax.f32 %v522, 0.0
    %v551 = vmax.f32 %v527, 0.0
    %v552 = vmax.f32 %v530, 0.0
    %v553 = vmax.f32 %v535, 0.0
    %v554 = vmax.f32 %v538, 0.0
    %v555 = vmax.f32 %v543, 0.0
    %v556 = vmax.f32 %v546, 0.0
    %v557 = vpack.c.bf16 %v550, %v549
    %v558 = vpack.c.bf16 %v552, %v551
    %v559 = vpack.c.bf16 %v554, %v553
    %v560 = vpack.c.bf16 %v556, %v555
    %v561 = vld [vmem:[%s5] sm:$0xf]
    %v562 = vld [vmem:[%s5 + $0x4] sm:$0xf]
    %v563 = vld [vmem:[%s5 + $0x8] sm:$0xf]
    %v564 = vld [vmem:[%s5 + $0xc] sm:$0xf]
    %v565 = vld [vmem:[#allocation6] sm:$0x1]
    %v567 = vlaneseq
    %v568 = vshrl.u32 %v567, 7
    %v569 = vsub.s32 0, %v568
    %v570 = vrot.slane %v565, %v569
    %v576 = vunpack.c.l.b16 %v561
    %v577 = vunpack.c.l.b16 %v562
    %v578 = vunpack.c.l.b16 %v563
    %v579 = vunpack.c.l.b16 %v564
    %v580 = vpack.c.b16 %v577, %v576
    %v581 = vpack.c.b16 %v579, %v578
    %v585 = vsel %vm471, %v557, 0
    %v588 = vsel %vm471, %v558, 0
    %v591 = vsel %vm471, %v559, 0
    %v594 = vsel %vm471, %v560, 0
    %596 = vmatprep.subr.bf16.mxu0 0
    %597 = vmatpush1.bf16.msra.mxu0 %v580
    %598 = vmatprep.subr.bf16.mxu0 0
    %599 = vmatpush1.bf16.msra.mxu0 %v581
    %600 = vmatprep.subr.bf16.mxu0 0
    %601 = vmatpush1.bf16.msra.mxu0 0
    %602 = vmatprep.subr.bf16.mxu0 0
    %603 = vmatpush1.bf16.msra.mxu0 0
    %604 = vmatprep.subr.bf16.mxu0 0
    %605 = vmatpush1.bf16.msra.mxu0 0
    %606 = vmatprep.subr.bf16.mxu0 0
    %607 = vmatpush1.bf16.msra.mxu0 0
    %608 = vmatprep.subr.bf16.mxu0 0
    %609 = vmatpush1.bf16.msra.mxu0 0
    %610 = vmatprep.subr.bf16.mxu0 0
    %611 = vmatpush1.bf16.msra.mxu0 0
    %612 = vmatprep.subr.bf16.mxu0 0
    %613 = vmatpush1.bf16.msra.mxu0 0
    %614 = vmatprep.subr.bf16.mxu0 0
    %615 = vmatpush1.bf16.msra.mxu0 0
    %616 = vmatprep.subr.bf16.mxu0 0
    %617 = vmatpush1.bf16.msra.mxu0 0
    %618 = vmatprep.subr.bf16.mxu0 0
    %619 = vmatpush1.bf16.msra.mxu0 0
    %620 = vmatprep.subr.bf16.mxu0 0
    %621 = vmatpush1.bf16.msra.mxu0 0
    %622 = vmatprep.subr.bf16.mxu0 0
    %623 = vmatpush1.bf16.msra.mxu0 0
    %624 = vmatprep.subr.bf16.mxu0 0
    %625 = vmatpush1.bf16.msra.mxu0 0
    %626 = vmatprep.subr.bf16.mxu0 0
    %627 = vmatpush1.bf16.msra.mxu0 0
    %628 = vmatprep.mubr.bf16.mxu0 0
    %629 = vmatmul.mubr.bf16.gmra.mrb[0].mxu0 %v585
    %v630 = vpop.f32.mrb[0].mxu0
    %v631 = vadd.f32 %v570, %v630
    %v632 = vpop.f32.mrb[0].mxu0
    %v633 = vpop.f32.mrb[0].mxu0
    %v634 = vadd.f32 %v570, %v633
    %v635 = vpop.f32.mrb[0].mxu0
    %636 = vmatprep.mubr.bf16.mxu0 0
    %637 = vmatmul.mubr.bf16.gmra.mrb[0].mxu0 %v588
    %v638 = vpop.f32.mrb[0].mxu0
    %v639 = vadd.f32 %v570, %v638
    %v640 = vpop.f32.mrb[0].mxu0
    %v641 = vpop.f32.mrb[0].mxu0
    %v642 = vadd.f32 %v570, %v641
    %v643 = vpop.f32.mrb[0].mxu0
    %644 = vmatprep.mubr.bf16.mxu0 0
    %645 = vmatmul.mubr.bf16.gmra.mrb[0].mxu0 %v591
    %v646 = vpop.f32.mrb[0].mxu0
    %v647 = vadd.f32 %v570, %v646
    %v648 = vpop.f32.mrb[0].mxu0
    %v649 = vpop.f32.mrb[0].mxu0
    %v650 = vadd.f32 %v570, %v649
    %v651 = vpop.f32.mrb[0].mxu0
    %652 = vmatprep.mubr.bf16.mxu0 0
    %653 = vmatmul.mubr.bf16.gmra.mrb[0].mxu0 %v594
    %v654 = vpop.f32.mrb[0].mxu0
    %v655 = vadd.f32 %v570, %v654
    %v656 = vpop.f32.mrb[0].mxu0
    %v657 = vpop.f32.mrb[0].mxu0
    %v658 = vadd.f32 %v570, %v657
    %v659 = vpop.f32.mrb[0].mxu0
    %660 = vdwg.mxu0
    %v661 = vmax.f32 %v631, 0.0
    %v662 = vmax.f32 %v634, 0.0
    %v663 = vmax.f32 %v639, 0.0
    %v664 = vmax.f32 %v642, 0.0
    %v665 = vmax.f32 %v647, 0.0
    %v666 = vmax.f32 %v650, 0.0
    %v667 = vmax.f32 %v655, 0.0
    %v668 = vmax.f32 %v658, 0.0
    %v669 = vpack.c.bf16 %v662, %v661
    %v670 = vpack.c.bf16 %v664, %v663
    %v671 = vpack.c.bf16 %v666, %v665
    %v672 = vpack.c.bf16 %v668, %v667
    %v673 = vld [vmem:[%s7] sm:$0xf]
    %v674 = vld [vmem:[%s7 + $0x4] sm:$0xf]
    %v675 = vld [vmem:[%s7 + $0x8] sm:$0xf]
    %v676 = vld [vmem:[%s7 + $0xc] sm:$0xf]
    %v677 = vld [vmem:[#allocation8] sm:$0x1]
    %v679 = vlaneseq
    %v680 = vshrl.u32 %v679, 7
    %v681 = vsub.s32 0, %v680
    %v682 = vrot.slane %v677, %v681
    %v688 = vunpack.c.l.b16 %v673
    %v689 = vunpack.c.l.b16 %v674
    %v690 = vunpack.c.l.b16 %v675
    %v691 = vunpack.c.l.b16 %v676
    %v692 = vpack.c.b16 %v689, %v688
    %v693 = vpack.c.b16 %v691, %v690
    %v697 = vsel %vm471, %v669, 0
    %v700 = vsel %vm471, %v670, 0
    %v703 = vsel %vm471, %v671, 0
    %v706 = vsel %vm471, %v672, 0
    %708 = vmatprep.subr.bf16.mxu0 0
    %709 = vmatpush1.bf16.msra.mxu0 %v692
    %710 = vmatprep.subr.bf16.mxu0 0
    %711 = vmatpush1.bf16.msra.mxu0 %v693
    %712 = vmatprep.subr.bf16.mxu0 0
    %713 = vmatpush1.bf16.msra.mxu0 0
    %714 = vmatprep.subr.bf16.mxu0 0
    %715 = vmatpush1.bf16.msra.mxu0 0
    %716 = vmatprep.subr.bf16.mxu0 0
    %717 = vmatpush1.bf16.msra.mxu0 0
    %718 = vmatprep.subr.bf16.mxu0 0
    %719 = vmatpush1.bf16.msra.mxu0 0
    %720 = vmatprep.subr.bf16.mxu0 0
    %721 = vmatpush1.bf16.msra.mxu0 0
    %722 = vmatprep.subr.bf16.mxu0 0
    %723 = vmatpush1.bf16.msra.mxu0 0
    %724 = vmatprep.subr.bf16.mxu0 0
    %725 = vmatpush1.bf16.msra.mxu0 0
    %726 = vmatprep.subr.bf16.mxu0 0
    %727 = vmatpush1.bf16.msra.mxu0 0
    %728 = vmatprep.subr.bf16.mxu0 0
    %729 = vmatpush1.bf16.msra.mxu0 0
    %730 = vmatprep.subr.bf16.mxu0 0
    %731 = vmatpush1.bf16.msra.mxu0 0
    %732 = vmatprep.subr.bf16.mxu0 0
    %733 = vmatpush1.bf16.msra.mxu0 0
    %734 = vmatprep.subr.bf16.mxu0 0
    %735 = vmatpush1.bf16.msra.mxu0 0
    %736 = vmatprep.subr.bf16.mxu0 0
    %737 = vmatpush1.bf16.msra.mxu0 0
    %738 = vmatprep.subr.bf16.mxu0 0
    %739 = vmatpush1.bf16.msra.mxu0 0
    %740 = vmatprep.mubr.bf16.mxu0 0
    %741 = vmatmul.mubr.bf16.gmra.mrb[0].mxu0 %v697
    %v742 = vpop.f32.mrb[0].mxu0
    %v743 = vadd.f32 %v682, %v742
    %v744 = vpop.f32.mrb[0].mxu0
    %v745 = vpop.f32.mrb[0].mxu0
    %v746 = vadd.f32 %v682, %v745
    %v747 = vpop.f32.mrb[0].mxu0
    %748 = vmatprep.mubr.bf16.mxu0 0
    %749 = vmatmul.mubr.bf16.gmra.mrb[0].mxu0 %v700
    %v750 = vpop.f32.mrb[0].mxu0
    %v751 = vadd.f32 %v682, %v750
    %v752 = vpop.f32.mrb[0].mxu0
    %v753 = vpop.f32.mrb[0].mxu0
    %v754 = vadd.f32 %v682, %v753
    %v755 = vpop.f32.mrb[0].mxu0
    %756 = vmatprep.mubr.bf16.mxu0 0
    %757 = vmatmul.mubr.bf16.gmra.mrb[0].mxu0 %v703
    %v758 = vpop.f32.mrb[0].mxu0
    %v759 = vadd.f32 %v682, %v758
    %v760 = vpop.f32.mrb[0].mxu0
    %v761 = vpop.f32.mrb[0].mxu0
    %v762 = vadd.f32 %v682, %v761
    %v763 = vpop.f32.mrb[0].mxu0
    %764 = vmatprep.mubr.bf16.mxu0 0
    %765 = vmatmul.mubr.bf16.gmra.mrb[0].mxu0 %v706
    %v766 = vpop.f32.mrb[0].mxu0
    %v767 = vadd.f32 %v682, %v766
    %v768 = vpop.f32.mrb[0].mxu0
    %v769 = vpop.f32.mrb[0].mxu0
    %v770 = vadd.f32 %v682, %v769
    %v771 = vpop.f32.mrb[0].mxu0
    %772 = vdwg.mxu0
    %773 = vst [vmem:[#allocation2] sm:$0xff] %v743
    %774 = vst [vmem:[#allocation2 + $0x8] sm:$0xff] %v746
    %775 = vst [vmem:[#allocation2 + $0x10] sm:$0xff] %v751
    %776 = vst [vmem:[#allocation2 + $0x18] sm:$0xff] %v754
    %777 = vst [vmem:[#allocation2 + $0x20] sm:$0xff] %v759
    %778 = vst [vmem:[#allocation2 + $0x28] sm:$0xff] %v762
    %779 = vst [vmem:[#allocation2 + $0x30] sm:$0xff] %v767
    %780 = vst [vmem:[#allocation2 + $0x38] sm:$0xff] %v770
    %v781 = vld [vmem:[%s8] sm:$0xf]
    %v782 = vld [vmem:[%s8 + $0x4] sm:$0xf]
    %v783 = vld [vmem:[%s8 + $0x8] sm:$0xf]
    %v784 = vld [vmem:[%s8 + $0xc] sm:$0xf]
    %v785 = vld [vmem:[#allocation2] sm:$0xff]
    %v790 = vunpack.c.l.b16 %v781
    %v791 = vunpack.c.l.b16 %v782
    %v792 = vunpack.c.l.b16 %v783
    %v793 = vunpack.c.l.b16 %v784
    %v794 = vpack.c.b16 %v791, %v790
    %v795 = vpack.c.b16 %v793, %v792
    %v799 = vsel %vm471, 0, 0
    %801 = vmatprep.subr.bf16.mxu0 0
    %802 = vmatpush1.bf16.msra.mxu0 %v794
    %803 = vmatprep.subr.bf16.mxu0 0
    %804 = vmatpush1.bf16.msra.mxu0 %v795
    %805 = vmatprep.subr.bf16.mxu0 0
    %806 = vmatpush1.bf16.msra.mxu0 0
    %807 = vmatprep.subr.bf16.mxu0 0
    %808 = vmatpush1.bf16.msra.mxu0 0
    %809 = vmatprep.subr.bf16.mxu0 0
    %810 = vmatpush1.bf16.msra.mxu0 0
    %811 = vmatprep.subr.bf16.mxu0 0
    %812 = vmatpush1.bf16.msra.mxu0 0
    %813 = vmatprep.subr.bf16.mxu0 0
    %814 = vmatpush1.bf16.msra.mxu0 0
    %815 = vmatprep.subr.bf16.mxu0 0
    %816 = vmatpush1.bf16.msra.mxu0 0
    %817 = vmatprep.subr.bf16.mxu0 0
    %818 = vmatpush1.bf16.msra.mxu0 0
    %819 = vmatprep.subr.bf16.mxu0 0
    %820 = vmatpush1.bf16.msra.mxu0 0
    %821 = vmatprep.subr.bf16.mxu0 0
    %822 = vmatpush1.bf16.msra.mxu0 0
    %823 = vmatprep.subr.bf16.mxu0 0
    %824 = vmatpush1.bf16.msra.mxu0 0
    %825 = vmatprep.subr.bf16.mxu0 0
    %826 = vmatpush1.bf16.msra.mxu0 0
    %827 = vmatprep.subr.bf16.mxu0 0
    %828 = vmatpush1.bf16.msra.mxu0 0
    %829 = vmatprep.subr.bf16.mxu0 0
    %830 = vmatpush1.bf16.msra.mxu0 0
    %831 = vmatprep.subr.bf16.mxu0 0
    %832 = vmatpush1.bf16.msra.mxu0 0
    %833 = vmatprep.mubr.bf16.mxu0 0
    %834 = vmatmul.mubr.bf16.gmra.mrb[0].mxu0 %v799
    %v835 = vpop.f32.mrb[0].mxu0
    %v836 = vadd.f32 0.0, %v835
    %v837 = vpop.f32.mrb[0].mxu0
    %v838 = vpop.f32.mrb[0].mxu0
    %v839 = vpop.f32.mrb[0].mxu0
    %840 = vdwg.mxu0
    %v841 = vadd.f32 %v785, %v836
    %v842 = vxor.u32 %v841, 2147483648
    %v843 = vmul.f32 %v842, 1.442695
    %v844 = vpow.pop %v843
    %v845 = vadd.f32 %v844, 1.0
    %v846 = vrcp.pop %v845
    %v847 = vmul.f32 1.0, %v846
    %v848 = vtanh.pop %v841
    %v849 = vmul.f32 %v847, 0.0
    %851 = vrot.lane.b32.xlu0 %v848, 64
    %v852 = vpop.permute.xlu0 %851
    %v854 = vmul.f32 %v847, %v852
    %856 = vrot.lane.b32.xlu0 %v854, 32
    %v857 = vpop.permute.xlu0 %856
    %v859 = vadd.f32 %v849, %v857
    %v860 = vtanh.pop %v859
    %862 = vrot.lane.b32.xlu0 %v860, 64
    %v863 = vpop.permute.xlu0 %862
    %v865 = vmul.f32 %v847, %v863
    %867 = vrot.lane.b32.xlu0 %v865, 32
    %v868 = vpop.permute.xlu0 %867
    %870 = vst.msk [vmem:[#allocation3] sm:$0xff] %vm471, %v868
    %s871 = scalar_lea.vmem [#allocation2], 8
    %v872 = vld [vmem:[%s871] sm:$0xff]
    %v873 = vpack.c.bf16 %v865, %v865
    %875 = vrot.lane.b32.xlu0 %v873, 32
    %v876 = vpop.permute.xlu0 %875
    %v878 = vsel %vm471, %v876, 0
    %880 = vmatprep.subr.bf16.mxu0 0
    %881 = vmatpush1.bf16.msra.mxu0 %v794
    %882 = vmatprep.subr.bf16.mxu0 0
    %883 = vmatpush1.bf16.msra.mxu0 %v795
    %884 = vmatprep.subr.bf16.mxu0 0
    %885 = vmatpush1.bf16.msra.mxu0 0
    %886 = vmatprep.subr.bf16.mxu0 0
    %887 = vmatpush1.bf16.msra.mxu0 0
    %888 = vmatprep.subr.bf16.mxu0 0
    %889 = vmatpush1.bf16.msra.mxu0 0
    %890 = vmatprep.subr.bf16.mxu0 0
    %891 = vmatpush1.bf16.msra.mxu0 0
    %892 = vmatprep.subr.bf16.mxu0 0
    %893 = vmatpush1.bf16.msra.mxu0 0
    %894 = vmatprep.subr.bf16.mxu0 0
    %895 = vmatpush1.bf16.msra.mxu0 0
    %896 = vmatprep.subr.bf16.mxu0 0
    %897 = vmatpush1.bf16.msra.mxu0 0
    %898 = vmatprep.subr.bf16.mxu0 0
    %899 = vmatpush1.bf16.msra.mxu0 0
    %900 = vmatprep.subr.bf16.mxu0 0
    %901 = vmatpush1.bf16.msra.mxu0 0
    %902 = vmatprep.subr.bf16.mxu0 0
    %903 = vmatpush1.bf16.msra.mxu0 0
    %904 = vmatprep.subr.bf16.mxu0 0
    %905 = vmatpush1.bf16.msra.mxu0 0
    %906 = vmatprep.subr.bf16.mxu0 0
    %907 = vmatpush1.bf16.msra.mxu0 0
    %908 = vmatprep.subr.bf16.mxu0 0
    %909 = vmatpush1.bf16.msra.mxu0 0
    %910 = vmatprep.subr.bf16.mxu0 0
    %911 = vmatpush1.bf16.msra.mxu0 0
    %912 = vmatprep.mubr.bf16.mxu0 0
    %913 = vmatmul.mubr.bf16.gmra.mrb[0].mxu0 %v878
    %v914 = vpop.f32.mrb[0].mxu0
    %v915 = vadd.f32 0.0, %v914
    %v916 = vpop.f32.mrb[0].mxu0
    %v917 = vpop.f32.mrb[0].mxu0
    %v918 = vpop.f32.mrb[0].mxu0
    %919 = vdwg.mxu0
    %v920 = vadd.f32 %v872, %v915
    %v921 = vxor.u32 %v920, 2147483648
    %v922 = vmul.f32 %v921, 1.442695
    %v923 = vpow.pop %v922
    %v924 = vadd.f32 %v923, 1.0
    %v925 = vrcp.pop %v924
    %v926 = vmul.f32 1.0, %v925
    %v927 = vtanh.pop %v920
    %v928 = vmul.f32 %v926, %v859
    %930 = vrot.lane.b32.xlu0 %v927, 64
    %v931 = vpop.permute.xlu0 %930
    %v933 = vmul.f32 %v926, %v931
    %935 = vrot.lane.b32.xlu0 %v933, 32
    %v936 = vpop.permute.xlu0 %935
    %v938 = vadd.f32 %v928, %v936
    %v939 = vtanh.pop %v938
    %941 = vrot.lane.b32.xlu0 %v939, 64
    %v942 = vpop.permute.xlu0 %941
    %v944 = vmul.f32 %v926, %v942
    %946 = vrot.lane.b32.xlu0 %v944, 32
    %v947 = vpop.permute.xlu0 %946
    %s949 = scalar_lea.vmem [#allocation3], 8
    %950 = vst.msk [vmem:[%s949] sm:$0xff] %vm471, %v947
    %s951 = scalar_lea.vmem [#allocation2], 16
    %v952 = vld [vmem:[%s951] sm:$0xff]
    %v953 = vpack.c.bf16 %v944, %v944
    %955 = vrot.lane.b32.xlu0 %v953, 32
    %v956 = vpop.permute.xlu0 %955
    %v958 = vsel %vm471, %v956, 0
    %960 = vmatprep.subr.bf16.mxu0 0
    %961 = vmatpush1.bf16.msra.mxu0 %v794
    %962 = vmatprep.subr.bf16.mxu0 0
    %963 = vmatpush1.bf16.msra.mxu0 %v795
    %964 = vmatprep.subr.bf16.mxu0 0
    %965 = vmatpush1.bf16.msra.mxu0 0
    %966 = vmatprep.subr.bf16.mxu0 0
    %967 = vmatpush1.bf16.msra.mxu0 0
    %968 = vmatprep.subr.bf16.mxu0 0
    %969 = vmatpush1.bf16.msra.mxu0 0
    %970 = vmatprep.subr.bf16.mxu0 0
    %971 = vmatpush1.bf16.msra.mxu0 0
    %972 = vmatprep.subr.bf16.mxu0 0
    %973 = vmatpush1.bf16.msra.mxu0 0
    %974 = vmatprep.subr.bf16.mxu0 0
    %975 = vmatpush1.bf16.msra.mxu0 0
    %976 = vmatprep.subr.bf16.mxu0 0
    %977 = vmatpush1.bf16.msra.mxu0 0
    %978 = vmatprep.subr.bf16.mxu0 0
    %979 = vmatpush1.bf16.msra.mxu0 0
    %980 = vmatprep.subr.bf16.mxu0 0
    %981 = vmatpush1.bf16.msra.mxu0 0
    %982 = vmatprep.subr.bf16.mxu0 0
    %983 = vmatpush1.bf16.msra.mxu0 0
    %984 = vmatprep.subr.bf16.mxu0 0
    %985 = vmatpush1.bf16.msra.mxu0 0
    %986 = vmatprep.subr.bf16.mxu0 0
    %987 = vmatpush1.bf16.msra.mxu0 0
    %988 = vmatprep.subr.bf16.mxu0 0
    %989 = vmatpush1.bf16.msra.mxu0 0
    %990 = vmatprep.subr.bf16.mxu0 0
    %991 = vmatpush1.bf16.msra.mxu0 0
    %992 = vmatprep.mubr.bf16.mxu0 0
    %993 = vmatmul.mubr.bf16.gmra.mrb[0].mxu0 %v958
    %v994 = vpop.f32.mrb[0].mxu0
    %v995 = vadd.f32 0.0, %v994
    %v996 = vpop.f32.mrb[0].mxu0
    %v997 = vpop.f32.mrb[0].mxu0
    %v998 = vpop.f32.mrb[0].mxu0
    %999 = vdwg.mxu0
    %v1000 = vadd.f32 %v952, %v995
    %v1001 = vxor.u32 %v1000, 2147483648
    %v1002 = vmul.f32 %v1001, 1.442695
    %v1003 = vpow.pop %v1002
    %v1004 = vadd.f32 %v1003, 1.0
    %v1005 = vrcp.pop %v1004
    %v1006 = vmul.f32 1.0, %v1005
    %v1007 = vtanh.pop %v1000
    %v1008 = vmul.f32 %v1006, %v938
    %1010 = vrot.lane.b32.xlu0 %v1007, 64
    %v1011 = vpop.permute.xlu0 %1010
    %v1013 = vmul.f32 %v1006, %v1011
    %1015 = vrot.lane.b32.xlu0 %v1013, 32
    %v1016 = vpop.permute.xlu0 %1015
    %v1018 = vadd.f32 %v1008, %v1016
    %v1019 = vtanh.pop %v1018
    %1021 = vrot.lane.b32.xlu0 %v1019, 64
    %v1022 = vpop.permute.xlu0 %1021
    %v1024 = vmul.f32 %v1006, %v1022
    %1026 = vrot.lane.b32.xlu0 %v1024, 32
    %v1027 = vpop.permute.xlu0 %1026
    %s1029 = scalar_lea.vmem [#allocation3], 16
    %1030 = vst.msk [vmem:[%s1029] sm:$0xff] %vm471, %v1027
    %s1031 = scalar_lea.vmem [#allocation2], 24
    %v1032 = vld [vmem:[%s1031] sm:$0xff]
    %v1033 = vpack.c.bf16 %v1024, %v1024
    %1035 = vrot.lane.b32.xlu0 %v1033, 32
    %v1036 = vpop.permute.xlu0 %1035
    %v1038 = vsel %vm471, %v1036, 0
    %1040 = vmatprep.subr.bf16.mxu0 0
    %1041 = vmatpush1.bf16.msra.mxu0 %v794
    %1042 = vmatprep.subr.bf16.mxu0 0
    %1043 = vmatpush1.bf16.msra.mxu0 %v795
    %1044 = vmatprep.subr.bf16.mxu0 0
    %1045 = vmatpush1.bf16.msra.mxu0 0
    %1046 = vmatprep.subr.bf16.mxu0 0
    %1047 = vmatpush1.bf16.msra.mxu0 0
    %1048 = vmatprep.subr.bf16.mxu0 0
    %1049 = vmatpush1.bf16.msra.mxu0 0
    %1050 = vmatprep.subr.bf16.mxu0 0
    %1051 = vmatpush1.bf16.msra.mxu0 0
    %1052 = vmatprep.subr.bf16.mxu0 0
    %1053 = vmatpush1.bf16.msra.mxu0 0
    %1054 = vmatprep.subr.bf16.mxu0 0
    %1055 = vmatpush1.bf16.msra.mxu0 0
    %1056 = vmatprep.subr.bf16.mxu0 0
    %1057 = vmatpush1.bf16.msra.mxu0 0
    %1058 = vmatprep.subr.bf16.mxu0 0
    %1059 = vmatpush1.bf16.msra.mxu0 0
    %1060 = vmatprep.subr.bf16.mxu0 0
    %1061 = vmatpush1.bf16.msra.mxu0 0
    %1062 = vmatprep.subr.bf16.mxu0 0
    %1063 = vmatpush1.bf16.msra.mxu0 0
    %1064 = vmatprep.subr.bf16.mxu0 0
    %1065 = vmatpush1.bf16.msra.mxu0 0
    %1066 = vmatprep.subr.bf16.mxu0 0
    %1067 = vmatpush1.bf16.msra.mxu0 0
    %1068 = vmatprep.subr.bf16.mxu0 0
    %1069 = vmatpush1.bf16.msra.mxu0 0
    %1070 = vmatprep.subr.bf16.mxu0 0
    %1071 = vmatpush1.bf16.msra.mxu0 0
    %1072 = vmatprep.mubr.bf16.mxu0 0
    %1073 = vmatmul.mubr.bf16.gmra.mrb[0].mxu0 %v1038
    %v1074 = vpop.f32.mrb[0].mxu0
    %v1075 = vadd.f32 0.0, %v1074
    %v1076 = vpop.f32.mrb[0].mxu0
    %v1077 = vpop.f32.mrb[0].mxu0
    %v1078 = vpop.f32.mrb[0].mxu0
    %1079 = vdwg.mxu0
    %v1080 = vadd.f32 %v1032, %v1075
    %v1081 = vxor.u32 %v1080, 2147483648
    %v1082 = vmul.f32 %v1081, 1.442695
    %v1083 = vpow.pop %v1082
    %v1084 = vadd.f32 %v1083, 1.0
    %v1085 = vrcp.pop %v1084
    %v1086 = vmul.f32 1.0, %v1085
    %v1087 = vtanh.pop %v1080
    %v1088 = vmul.f32 %v1086, %v1018
    %1090 = vrot.lane.b32.xlu0 %v1087, 64
    %v1091 = vpop.permute.xlu0 %1090
    %v1093 = vmul.f32 %v1086, %v1091
    %1095 = vrot.lane.b32.xlu0 %v1093, 32
    %v1096 = vpop.permute.xlu0 %1095
    %v1098 = vadd.f32 %v1088, %v1096
    %v1099 = vtanh.pop %v1098
    %1101 = vrot.lane.b32.xlu0 %v1099, 64
    %v1102 = vpop.permute.xlu0 %1101
    %v1104 = vmul.f32 %v1086, %v1102
    %1106 = vrot.lane.b32.xlu0 %v1104, 32
    %v1107 = vpop.permute.xlu0 %1106
    %s1109 = scalar_lea.vmem [#allocation3], 24
    %1110 = vst.msk [vmem:[%s1109] sm:$0xff] %vm471, %v1107
    %s1111 = scalar_lea.vmem [#allocation2], 32
    %v1112 = vld [vmem:[%s1111] sm:$0xff]
    %v1113 = vpack.c.bf16 %v1104, %v1104
    %1115 = vrot.lane.b32.xlu0 %v1113, 32
    %v1116 = vpop.permute.xlu0 %1115
    %v1118 = vsel %vm471, %v1116, 0
    %1120 = vmatprep.subr.bf16.mxu0 0
    %1121 = vmatpush1.bf16.msra.mxu0 %v794
    %1122 = vmatprep.subr.bf16.mxu0 0
    %1123 = vmatpush1.bf16.msra.mxu0 %v795
    %1124 = vmatprep.subr.bf16.mxu0 0
    %1125 = vmatpush1.bf16.msra.mxu0 0
    %1126 = vmatprep.subr.bf16.mxu0 0
    %1127 = vmatpush1.bf16.msra.mxu0 0
    %1128 = vmatprep.subr.bf16.mxu0 0
    %1129 = vmatpush1.bf16.msra.mxu0 0
    %1130 = vmatprep.subr.bf16.mxu0 0
    %1131 = vmatpush1.bf16.msra.mxu0 0
    %1132 = vmatprep.subr.bf16.mxu0 0
    %1133 = vmatpush1.bf16.msra.mxu0 0
    %1134 = vmatprep.subr.bf16.mxu0 0
    %1135 = vmatpush1.bf16.msra.mxu0 0
    %1136 = vmatprep.subr.bf16.mxu0 0
    %1137 = vmatpush1.bf16.msra.mxu0 0
    %1138 = vmatprep.subr.bf16.mxu0 0
    %1139 = vmatpush1.bf16.msra.mxu0 0
    %1140 = vmatprep.subr.bf16.mxu0 0
    %1141 = vmatpush1.bf16.msra.mxu0 0
    %1142 = vmatprep.subr.bf16.mxu0 0
    %1143 = vmatpush1.bf16.msra.mxu0 0
    %1144 = vmatprep.subr.bf16.mxu0 0
    %1145 = vmatpush1.bf16.msra.mxu0 0
    %1146 = vmatprep.subr.bf16.mxu0 0
    %1147 = vmatpush1.bf16.msra.mxu0 0
    %1148 = vmatprep.subr.bf16.mxu0 0
    %1149 = vmatpush1.bf16.msra.mxu0 0
    %1150 = vmatprep.subr.bf16.mxu0 0
    %1151 = vmatpush1.bf16.msra.mxu0 0
    %1152 = vmatprep.mubr.bf16.mxu0 0
    %1153 = vmatmul.mubr.bf16.gmra.mrb[0].mxu0 %v1118
    %v1154 = vpop.f32.mrb[0].mxu0
    %v1155 = vadd.f32 0.0, %v1154
    %v1156 = vpop.f32.mrb[0].mxu0
    %v1157 = vpop.f32.mrb[0].mxu0
    %v1158 = vpop.f32.mrb[0].mxu0
    %1159 = vdwg.mxu0
    %v1160 = vadd.f32 %v1112, %v1155
    %v1161 = vxor.u32 %v1160, 2147483648
    %v1162 = vmul.f32 %v1161, 1.442695
    %v1163 = vpow.pop %v1162
    %v1164 = vadd.f32 %v1163, 1.0
    %v1165 = vrcp.pop %v1164
    %v1166 = vmul.f32 1.0, %v1165
    %v1167 = vtanh.pop %v1160
    %v1168 = vmul.f32 %v1166, %v1098
    %1170 = vrot.lane.b32.xlu0 %v1167, 64
    %v1171 = vpop.permute.xlu0 %1170
    %v1173 = vmul.f32 %v1166, %v1171
    %1175 = vrot.lane.b32.xlu0 %v1173, 32
    %v1176 = vpop.permute.xlu0 %1175
    %v1178 = vadd.f32 %v1168, %v1176
    %v1179 = vtanh.pop %v1178
    %1181 = vrot.lane.b32.xlu0 %v1179, 64
    %v1182 = vpop.permute.xlu0 %1181
    %v1184 = vmul.f32 %v1166, %v1182
    %1186 = vrot.lane.b32.xlu0 %v1184, 32
    %v1187 = vpop.permute.xlu0 %1186
    %s1189 = scalar_lea.vmem [#allocation3], 32
    %1190 = vst.msk [vmem:[%s1189] sm:$0xff] %vm471, %v1187
    %s1191 = scalar_lea.vmem [#allocation2], 40
    %v1192 = vld [vmem:[%s1191] sm:$0xff]
    %v1193 = vpack.c.bf16 %v1184, %v1184
    %1195 = vrot.lane.b32.xlu0 %v1193, 32
    %v1196 = vpop.permute.xlu0 %1195
    %v1198 = vsel %vm471, %v1196, 0
    %1200 = vmatprep.subr.bf16.mxu0 0
    %1201 = vmatpush1.bf16.msra.mxu0 %v794
    %1202 = vmatprep.subr.bf16.mxu0 0
    %1203 = vmatpush1.bf16.msra.mxu0 %v795
    %1204 = vmatprep.subr.bf16.mxu0 0
    %1205 = vmatpush1.bf16.msra.mxu0 0
    %1206 = vmatprep.subr.bf16.mxu0 0
    %1207 = vmatpush1.bf16.msra.mxu0 0
    %1208 = vmatprep.subr.bf16.mxu0 0
    %1209 = vmatpush1.bf16.msra.mxu0 0
    %1210 = vmatprep.subr.bf16.mxu0 0
    %1211 = vmatpush1.bf16.msra.mxu0 0
    %1212 = vmatprep.subr.bf16.mxu0 0
    %1213 = vmatpush1.bf16.msra.mxu0 0
    %1214 = vmatprep.subr.bf16.mxu0 0
    %1215 = vmatpush1.bf16.msra.mxu0 0
    %1216 = vmatprep.subr.bf16.mxu0 0
    %1217 = vmatpush1.bf16.msra.mxu0 0
    %1218 = vmatprep.subr.bf16.mxu0 0
    %1219 = vmatpush1.bf16.msra.mxu0 0
    %1220 = vmatprep.subr.bf16.mxu0 0
    %1221 = vmatpush1.bf16.msra.mxu0 0
    %1222 = vmatprep.subr.bf16.mxu0 0
    %1223 = vmatpush1.bf16.msra.mxu0 0
    %1224 = vmatprep.subr.bf16.mxu0 0
    %1225 = vmatpush1.bf16.msra.mxu0 0
    %1226 = vmatprep.subr.bf16.mxu0 0
    %1227 = vmatpush1.bf16.msra.mxu0 0
    %1228 = vmatprep.subr.bf16.mxu0 0
    %1229 = vmatpush1.bf16.msra.mxu0 0
    %1230 = vmatprep.subr.bf16.mxu0 0
    %1231 = vmatpush1.bf16.msra.mxu0 0
    %1232 = vmatprep.mubr.bf16.mxu0 0
    %1233 = vmatmul.mubr.bf16.gmra.mrb[0].mxu0 %v1198
    %v1234 = vpop.f32.mrb[0].mxu0
    %v1235 = vadd.f32 0.0, %v1234
    %v1236 = vpop.f32.mrb[0].mxu0
    %v1237 = vpop.f32.mrb[0].mxu0
    %v1238 = vpop.f32.mrb[0].mxu0
    %1239 = vdwg.mxu0
    %v1240 = vadd.f32 %v1192, %v1235
    %v1241 = vxor.u32 %v1240, 2147483648
    %v1242 = vmul.f32 %v1241, 1.442695
    %v1243 = vpow.pop %v1242
    %v1244 = vadd.f32 %v1243, 1.0
    %v1245 = vrcp.pop %v1244
    %v1246 = vmul.f32 1.0, %v1245
    %v1247 = vtanh.pop %v1240
    %v1248 = vmul.f32 %v1246, %v1178
    %1250 = vrot.lane.b32.xlu0 %v1247, 64
    %v1251 = vpop.permute.xlu0 %1250
    %v1253 = vmul.f32 %v1246, %v1251
    %1255 = vrot.lane.b32.xlu0 %v1253, 32
    %v1256 = vpop.permute.xlu0 %1255
    %v1258 = vadd.f32 %v1248, %v1256
    %v1259 = vtanh.pop %v1258
    %1261 = vrot.lane.b32.xlu0 %v1259, 64
    %v1262 = vpop.permute.xlu0 %1261
    %v1264 = vmul.f32 %v1246, %v1262
    %1266 = vrot.lane.b32.xlu0 %v1264, 32
    %v1267 = vpop.permute.xlu0 %1266
    %s1269 = scalar_lea.vmem [#allocation3], 40
    %1270 = vst.msk [vmem:[%s1269] sm:$0xff] %vm471, %v1267
    %s1271 = scalar_lea.vmem [#allocation2], 48
    %v1272 = vld [vmem:[%s1271] sm:$0xff]
    %v1273 = vpack.c.bf16 %v1264, %v1264
    %1275 = vrot.lane.b32.xlu0 %v1273, 32
    %v1276 = vpop.permute.xlu0 %1275
    %v1278 = vsel %vm471, %v1276, 0
    %1280 = vmatprep.subr.bf16.mxu0 0
    %1281 = vmatpush1.bf16.msra.mxu0 %v794
    %1282 = vmatprep.subr.bf16.mxu0 0
    %1283 = vmatpush1.bf16.msra.mxu0 %v795
    %1284 = vmatprep.subr.bf16.mxu0 0
    %1285 = vmatpush1.bf16.msra.mxu0 0
    %1286 = vmatprep.subr.bf16.mxu0 0
    %1287 = vmatpush1.bf16.msra.mxu0 0
    %1288 = vmatprep.subr.bf16.mxu0 0
    %1289 = vmatpush1.bf16.msra.mxu0 0
    %1290 = vmatprep.subr.bf16.mxu0 0
    %1291 = vmatpush1.bf16.msra.mxu0 0
    %1292 = vmatprep.subr.bf16.mxu0 0
    %1293 = vmatpush1.bf16.msra.mxu0 0
    %1294 = vmatprep.subr.bf16.mxu0 0
    %1295 = vmatpush1.bf16.msra.mxu0 0
    %1296 = vmatprep.subr.bf16.mxu0 0
    %1297 = vmatpush1.bf16.msra.mxu0 0
    %1298 = vmatprep.subr.bf16.mxu0 0
    %1299 = vmatpush1.bf16.msra.mxu0 0
    %1300 = vmatprep.subr.bf16.mxu0 0
    %1301 = vmatpush1.bf16.msra.mxu0 0
    %1302 = vmatprep.subr.bf16.mxu0 0
    %1303 = vmatpush1.bf16.msra.mxu0 0
    %1304 = vmatprep.subr.bf16.mxu0 0
    %1305 = vmatpush1.bf16.msra.mxu0 0
    %1306 = vmatprep.subr.bf16.mxu0 0
    %1307 = vmatpush1.bf16.msra.mxu0 0
    %1308 = vmatprep.subr.bf16.mxu0 0
    %1309 = vmatpush1.bf16.msra.mxu0 0
    %1310 = vmatprep.subr.bf16.mxu0 0
    %1311 = vmatpush1.bf16.msra.mxu0 0
    %1312 = vmatprep.mubr.bf16.mxu0 0
    %1313 = vmatmul.mubr.bf16.gmra.mrb[0].mxu0 %v1278
    %v1314 = vpop.f32.mrb[0].mxu0
    %v1315 = vadd.f32 0.0, %v1314
    %v1316 = vpop.f32.mrb[0].mxu0
    %v1317 = vpop.f32.mrb[0].mxu0
    %v1318 = vpop.f32.mrb[0].mxu0
    %1319 = vdwg.mxu0
    %v1320 = vadd.f32 %v1272, %v1315
    %v1321 = vxor.u32 %v1320, 2147483648
    %v1322 = vmul.f32 %v1321, 1.442695
    %v1323 = vpow.pop %v1322
    %v1324 = vadd.f32 %v1323, 1.0
    %v1325 = vrcp.pop %v1324
    %v1326 = vmul.f32 1.0, %v1325
    %v1327 = vtanh.pop %v1320
    %v1328 = vmul.f32 %v1326, %v1258
    %1330 = vrot.lane.b32.xlu0 %v1327, 64
    %v1331 = vpop.permute.xlu0 %1330
    %v1333 = vmul.f32 %v1326, %v1331
    %1335 = vrot.lane.b32.xlu0 %v1333, 32
    %v1336 = vpop.permute.xlu0 %1335
    %v1338 = vadd.f32 %v1328, %v1336
    %v1339 = vtanh.pop %v1338
    %1341 = vrot.lane.b32.xlu0 %v1339, 64
    %v1342 = vpop.permute.xlu0 %1341
    %v1344 = vmul.f32 %v1326, %v1342
    %1346 = vrot.lane.b32.xlu0 %v1344, 32
    %v1347 = vpop.permute.xlu0 %1346
    %s1349 = scalar_lea.vmem [#allocation3], 48
    %1350 = vst.msk [vmem:[%s1349] sm:$0xff] %vm471, %v1347
    %s1351 = scalar_lea.vmem [#allocation2], 56
    %v1352 = vld [vmem:[%s1351] sm:$0xff]
    %v1353 = vpack.c.bf16 %v1344, %v1344
    %1355 = vrot.lane.b32.xlu0 %v1353, 32
    %v1356 = vpop.permute.xlu0 %1355
    %v1358 = vsel %vm471, %v1356, 0
    %1360 = vmatprep.subr.bf16.mxu0 0
    %1361 = vmatpush1.bf16.msra.mxu0 %v794
    %1362 = vmatprep.subr.bf16.mxu0 0
    %1363 = vmatpush1.bf16.msra.mxu0 %v795
    %1364 = vmatprep.subr.bf16.mxu0 0
    %1365 = vmatpush1.bf16.msra.mxu0 0
    %1366 = vmatprep.subr.bf16.mxu0 0
    %1367 = vmatpush1.bf16.msra.mxu0 0
    %1368 = vmatprep.subr.bf16.mxu0 0
    %1369 = vmatpush1.bf16.msra.mxu0 0
    %1370 = vmatprep.subr.bf16.mxu0 0
    %1371 = vmatpush1.bf16.msra.mxu0 0
    %1372 = vmatprep.subr.bf16.mxu0 0
    %1373 = vmatpush1.bf16.msra.mxu0 0
    %1374 = vmatprep.subr.bf16.mxu0 0
    %1375 = vmatpush1.bf16.msra.mxu0 0
    %1376 = vmatprep.subr.bf16.mxu0 0
    %1377 = vmatpush1.bf16.msra.mxu0 0
    %1378 = vmatprep.subr.bf16.mxu0 0
    %1379 = vmatpush1.bf16.msra.mxu0 0
    %1380 = vmatprep.subr.bf16.mxu0 0
    %1381 = vmatpush1.bf16.msra.mxu0 0
    %1382 = vmatprep.subr.bf16.mxu0 0
    %1383 = vmatpush1.bf16.msra.mxu0 0
    %1384 = vmatprep.subr.bf16.mxu0 0
    %1385 = vmatpush1.bf16.msra.mxu0 0
    %1386 = vmatprep.subr.bf16.mxu0 0
    %1387 = vmatpush1.bf16.msra.mxu0 0
    %1388 = vmatprep.subr.bf16.mxu0 0
    %1389 = vmatpush1.bf16.msra.mxu0 0
    %1390 = vmatprep.subr.bf16.mxu0 0
    %1391 = vmatpush1.bf16.msra.mxu0 0
    %1392 = vmatprep.mubr.bf16.mxu0 0
    %1393 = vmatmul.mubr.bf16.gmra.mrb[0].mxu0 %v1358
    %v1394 = vpop.f32.mrb[0].mxu0
    %v1395 = vadd.f32 0.0, %v1394
    %v1396 = vpop.f32.mrb[0].mxu0
    %v1397 = vpop.f32.mrb[0].mxu0
    %v1398 = vpop.f32.mrb[0].mxu0
    %1399 = vdwg.mxu0
    %v1400 = vadd.f32 %v1352, %v1395
    %v1401 = vxor.u32 %v1400, 2147483648
    %v1402 = vmul.f32 %v1401, 1.442695
    %v1403 = vpow.pop %v1402
    %v1404 = vadd.f32 %v1403, 1.0
    %v1405 = vrcp.pop %v1404
    %v1406 = vmul.f32 1.0, %v1405
    %v1407 = vtanh.pop %v1400
    %v1408 = vmul.f32 %v1406, %v1338
    %1410 = vrot.lane.b32.xlu0 %v1407, 64
    %v1411 = vpop.permute.xlu0 %1410
    %v1413 = vmul.f32 %v1406, %v1411
    %1415 = vrot.lane.b32.xlu0 %v1413, 32
    %v1416 = vpop.permute.xlu0 %1415
    %v1418 = vadd.f32 %v1408, %v1416
    %v1419 = vtanh.pop %v1418
    %1421 = vrot.lane.b32.xlu0 %v1419, 64
    %v1422 = vpop.permute.xlu0 %1421
    %v1424 = vmul.f32 %v1406, %v1422
    %1426 = vrot.lane.b32.xlu0 %v1424, 32
    %v1427 = vpop.permute.xlu0 %1426
    %s1429 = scalar_lea.vmem [#allocation3], 56
    %1430 = vst.msk [vmem:[%s1429] sm:$0xff] %vm471, %v1427
    %v1431 = vld [vmem:[#allocation3] sm:$0xff]
    %v1432 = vld [vmem:[#allocation3 + $0x8] sm:$0xff]
    %v1433 = vld [vmem:[#allocation3 + $0x10] sm:$0xff]
    %v1434 = vld [vmem:[#allocation3 + $0x18] sm:$0xff]
    %v1435 = vld [vmem:[#allocation3 + $0x20] sm:$0xff]
    %v1436 = vld [vmem:[#allocation3 + $0x28] sm:$0xff]
    %v1437 = vld [vmem:[#allocation3 + $0x30] sm:$0xff]
    %v1438 = vld [vmem:[#allocation3 + $0x38] sm:$0xff]
    %v1439 = vpack.c.bf16 %v1432, %v1431
    %v1440 = vpack.c.bf16 %v1434, %v1433
    %v1441 = vpack.c.bf16 %v1436, %v1435
    %v1442 = vpack.c.bf16 %v1438, %v1437
    %v1443 = vld [vmem:[%s10] sm:$0xf]
    %v1444 = vld [vmem:[%s10 + $0x4] sm:$0xf]
    %v1445 = vld [vmem:[%s10 + $0x8] sm:$0xf]
    %v1446 = vld [vmem:[%s10 + $0xc] sm:$0xf]
    %v1447 = vld [vmem:[#allocation9] sm:$0x1]
    %v1449 = vlaneseq
    %v1450 = vshrl.u32 %v1449, 7
    %v1451 = vsub.s32 0, %v1450
    %v1452 = vrot.slane %v1447, %v1451
    %v1458 = vunpack.c.l.b16 %v1443
    %v1459 = vunpack.c.l.b16 %v1444
    %v1460 = vunpack.c.l.b16 %v1445
    %v1461 = vunpack.c.l.b16 %v1446
    %v1462 = vpack.c.b16 %v1459, %v1458
    %v1463 = vpack.c.b16 %v1461, %v1460
    %v1467 = vsel %vm471, %v1439, 0
    %v1470 = vsel %vm471, %v1440, 0
    %v1473 = vsel %vm471, %v1441, 0
    %v1476 = vsel %vm471, %v1442, 0
    %1478 = vmatprep.subr.bf16.mxu0 0
    %1479 = vmatpush1.bf16.msra.mxu0 %v1462
    %1480 = vmatprep.subr.bf16.mxu0 0
    %1481 = vmatpush1.bf16.msra.mxu0 %v1463
    %1482 = vmatprep.subr.bf16.mxu0 0
    %1483 = vmatpush1.bf16.msra.mxu0 0
    %1484 = vmatprep.subr.bf16.mxu0 0
    %1485 = vmatpush1.bf16.msra.mxu0 0
    %1486 = vmatprep.subr.bf16.mxu0 0
    %1487 = vmatpush1.bf16.msra.mxu0 0
    %1488 = vmatprep.subr.bf16.mxu0 0
    %1489 = vmatpush1.bf16.msra.mxu0 0
    %1490 = vmatprep.subr.bf16.mxu0 0
    %1491 = vmatpush1.bf16.msra.mxu0 0
    %1492 = vmatprep.subr.bf16.mxu0 0
    %1493 = vmatpush1.bf16.msra.mxu0 0
    %1494 = vmatprep.subr.bf16.mxu0 0
    %1495 = vmatpush1.bf16.msra.mxu0 0
    %1496 = vmatprep.subr.bf16.mxu0 0
    %1497 = vmatpush1.bf16.msra.mxu0 0
    %1498 = vmatprep.subr.bf16.mxu0 0
    %1499 = vmatpush1.bf16.msra.mxu0 0
    %1500 = vmatprep.subr.bf16.mxu0 0
    %1501 = vmatpush1.bf16.msra.mxu0 0
    %1502 = vmatprep.subr.bf16.mxu0 0
    %1503 = vmatpush1.bf16.msra.mxu0 0
    %1504 = vmatprep.subr.bf16.mxu0 0
    %1505 = vmatpush1.bf16.msra.mxu0 0
    %1506 = vmatprep.subr.bf16.mxu0 0
    %1507 = vmatpush1.bf16.msra.mxu0 0
    %1508 = vmatprep.subr.bf16.mxu0 0
    %1509 = vmatpush1.bf16.msra.mxu0 0
    %1510 = vmatprep.mubr.bf16.mxu0 0
    %1511 = vmatmul.mubr.bf16.gmra.mrb[0].mxu0 %v1467
    %v1512 = vpop.f32.mrb[0].mxu0
    %v1513 = vadd.f32 %v1452, %v1512
    %v1514 = vpop.f32.mrb[0].mxu0
    %v1515 = vpop.f32.mrb[0].mxu0
    %v1516 = vadd.f32 %v1452, %v1515
    %v1517 = vpop.f32.mrb[0].mxu0
    %1518 = vmatprep.mubr.bf16.mxu0 0
    %1519 = vmatmul.mubr.bf16.gmra.mrb[0].mxu0 %v1470
    %v1520 = vpop.f32.mrb[0].mxu0
    %v1521 = vadd.f32 %v1452, %v1520
    %v1522 = vpop.f32.mrb[0].mxu0
    %v1523 = vpop.f32.mrb[0].mxu0
    %v1524 = vadd.f32 %v1452, %v1523
    %v1525 = vpop.f32.mrb[0].mxu0
    %1526 = vmatprep.mubr.bf16.mxu0 0
    %1527 = vmatmul.mubr.bf16.gmra.mrb[0].mxu0 %v1473
    %v1528 = vpop.f32.mrb[0].mxu0
    %v1529 = vadd.f32 %v1452, %v1528
    %v1530 = vpop.f32.mrb[0].mxu0
    %v1531 = vpop.f32.mrb[0].mxu0
    %v1532 = vadd.f32 %v1452, %v1531
    %v1533 = vpop.f32.mrb[0].mxu0
    %1534 = vmatprep.mubr.bf16.mxu0 0
    %1535 = vmatmul.mubr.bf16.gmra.mrb[0].mxu0 %v1476
    %v1536 = vpop.f32.mrb[0].mxu0
    %v1537 = vadd.f32 %v1452, %v1536
    %v1538 = vpop.f32.mrb[0].mxu0
    %v1539 = vpop.f32.mrb[0].mxu0
    %v1540 = vadd.f32 %v1452, %v1539
    %v1541 = vpop.f32.mrb[0].mxu0
    %1542 = vdwg.mxu0
    %v1543 = vmax.f32 %v1513, 0.0
    %v1544 = vmax.f32 %v1516, 0.0
    %v1545 = vmax.f32 %v1521, 0.0
    %v1546 = vmax.f32 %v1524, 0.0
    %v1547 = vmax.f32 %v1529, 0.0
    %v1548 = vmax.f32 %v1532, 0.0
    %v1549 = vmax.f32 %v1537, 0.0
    %v1550 = vmax.f32 %v1540, 0.0
    %v1551 = vpack.c.bf16 %v1544, %v1543
    %v1552 = vpack.c.bf16 %v1546, %v1545
    %v1553 = vpack.c.bf16 %v1548, %v1547
    %v1554 = vpack.c.bf16 %v1550, %v1549
    %v1555 = vld [vmem:[%s12] sm:$0xf]
    %v1556 = vld [vmem:[%s12 + $0x4] sm:$0xf]
    %v1557 = vld [vmem:[%s12 + $0x8] sm:$0xf]
    %v1558 = vld [vmem:[%s12 + $0xc] sm:$0xf]
    %v1563 = vunpack.c.l.b16 %v1555
    %v1564 = vunpack.c.l.b16 %v1556
    %v1565 = vunpack.c.l.b16 %v1557
    %v1566 = vunpack.c.l.b16 %v1558
    %v1567 = vpack.c.b16 %v1564, %v1563
    %v1568 = vpack.c.b16 %v1566, %v1565
    %v1572 = vsel %vm471, %v1551, 0
    %v1575 = vsel %vm471, %v1552, 0
    %v1578 = vsel %vm471, %v1553, 0
    %v1581 = vsel %vm471, %v1554, 0
    %1583 = vmatprep.subr.bf16.mxu0 0
    %1584 = vmatpush1.bf16.msra.mxu0 %v1567
    %1585 = vmatprep.subr.bf16.mxu0 0
    %1586 = vmatpush1.bf16.msra.mxu0 %v1568
    %1587 = vmatprep.subr.bf16.mxu0 0
    %1588 = vmatpush1.bf16.msra.mxu0 0
    %1589 = vmatprep.subr.bf16.mxu0 0
    %1590 = vmatpush1.bf16.msra.mxu0 0
    %1591 = vmatprep.subr.bf16.mxu0 0
    %1592 = vmatpush1.bf16.msra.mxu0 0
    %1593 = vmatprep.subr.bf16.mxu0 0
    %1594 = vmatpush1.bf16.msra.mxu0 0
    %1595 = vmatprep.subr.bf16.mxu0 0
    %1596 = vmatpush1.bf16.msra.mxu0 0
    %1597 = vmatprep.subr.bf16.mxu0 0
    %1598 = vmatpush1.bf16.msra.mxu0 0
    %1599 = vmatprep.subr.bf16.mxu0 0
    %1600 = vmatpush1.bf16.msra.mxu0 0
    %1601 = vmatprep.subr.bf16.mxu0 0
    %1602 = vmatpush1.bf16.msra.mxu0 0
    %1603 = vmatprep.subr.bf16.mxu0 0
    %1604 = vmatpush1.bf16.msra.mxu0 0
    %1605 = vmatprep.subr.bf16.mxu0 0
    %1606 = vmatpush1.bf16.msra.mxu0 0
    %1607 = vmatprep.subr.bf16.mxu0 0
    %1608 = vmatpush1.bf16.msra.mxu0 0
    %1609 = vmatprep.subr.bf16.mxu0 0
    %1610 = vmatpush1.bf16.msra.mxu0 0
    %1611 = vmatprep.subr.bf16.mxu0 0
    %1612 = vmatpush1.bf16.msra.mxu0 0
    %1613 = vmatprep.subr.bf16.mxu0 0
    %1614 = vmatpush1.bf16.msra.mxu0 0
    %1615 = vmatprep.mubr.bf16.mxu0 0
    %1616 = vmatmul.mubr.bf16.gmra.mrb[0].mxu0 %v1572
    %v1617 = vpop.f32.mrb[0].mxu0
    %v1618 = vadd.f32 0.0, %v1617
    %v1619 = vpop.f32.mrb[0].mxu0
    %v1620 = vpop.f32.mrb[0].mxu0
    %v1621 = vadd.f32 0.0, %v1620
    %v1622 = vpop.f32.mrb[0].mxu0
    %1623 = vmatprep.mubr.bf16.mxu0 0
    %1624 = vmatmul.mubr.bf16.gmra.mrb[0].mxu0 %v1575
    %v1625 = vpop.f32.mrb[0].mxu0
    %v1626 = vadd.f32 0.0, %v1625
    %v1627 = vpop.f32.mrb[0].mxu0
    %v1628 = vpop.f32.mrb[0].mxu0
    %v1629 = vadd.f32 0.0, %v1628
    %v1630 = vpop.f32.mrb[0].mxu0
    %1631 = vmatprep.mubr.bf16.mxu0 0
    %1632 = vmatmul.mubr.bf16.gmra.mrb[0].mxu0 %v1578
    %v1633 = vpop.f32.mrb[0].mxu0
    %v1634 = vadd.f32 0.0, %v1633
    %v1635 = vpop.f32.mrb[0].mxu0
    %v1636 = vpop.f32.mrb[0].mxu0
    %v1637 = vadd.f32 0.0, %v1636
    %v1638 = vpop.f32.mrb[0].mxu0
    %1639 = vmatprep.mubr.bf16.mxu0 0
    %1640 = vmatmul.mubr.bf16.gmra.mrb[0].mxu0 %v1581
    %v1641 = vpop.f32.mrb[0].mxu0
    %v1642 = vadd.f32 0.0, %v1641
    %v1643 = vpop.f32.mrb[0].mxu0
    %v1644 = vpop.f32.mrb[0].mxu0
    %v1645 = vadd.f32 0.0, %v1644
    %v1646 = vpop.f32.mrb[0].mxu0
    %1647 = vdwg.mxu0
    %1648 = vst.msk [vmem:[%s13] sm:$0xff] %vm132, %v1618
    %1649 = vst.msk [vmem:[%s13 + $0x8] sm:$0xff] %vm132, %v1621
    %1650 = vst.msk [vmem:[%s13 + $0x10] sm:$0xff] %vm132, %v1626
    %1651 = vst.msk [vmem:[%s13 + $0x18] sm:$0xff] %vm132, %v1629
    %1652 = vst.msk [vmem:[%s13 + $0x20] sm:$0xff] %vm132, %v1634
    %1653 = vst.msk [vmem:[%s13 + $0x28] sm:$0xff] %vm132, %v1637
    %1654 = vst.msk [vmem:[%s13 + $0x30] sm:$0xff] %vm132, %v1642
    %1655 = vst.msk [vmem:[%s13 + $0x38] sm:$0xff] %vm132, %v1645
    // Predicated region
    $region70: #{tpu_custom_call.1} parent=1 // pred_check
      _
    $region71: #{tpu_custom_call.1} parent=1 // pred_check_branch
      %1657 = sbr.rel (0) target = $region73
    $region72: #{tpu_custom_call.1} parent=1 // pred_region
      _
    $region73: #{tpu_custom_call.1} parent=1 // pred_fallthru
      _
    // Predicated region
    $region74: #{tpu_custom_call.1} parent=1 // pred_check
      _
    $region75: #{tpu_custom_call.1} parent=1 // pred_check_branch
      %1659 = sbr.rel (0) target = $region77
    $region76: #{tpu_custom_call.1} parent=1 // pred_region
      _
    $region77: #{tpu_custom_call.1} parent=1 // pred_fallthru
      _
    %1660 = vsyncpa [#allocation5], 1
    %1661 = vsyncpa [#allocation7], 1
    %1662 = vsyncpa [#allocation10], 1

</llo_original>
